<compile_context>
chip_gen: v5e
topology: v5e:2x2
jax: 0.10.0
libtpu: 0.0.40
codegen_flags: <defaults>
</compile_context>

<pallas_src>
import functools

import jax
import jax.numpy as jnp
from jax.experimental import pallas as pl
from jax.experimental.pallas import tpu as pltpu


# ----------------------------- helpers --------------------------------------


def _rms(z, eps=1e-6):
    # matches torch rmsnorm (inputs here are fp32)
    return z * jax.lax.rsqrt(jnp.mean(z * z, axis=-1, keepdims=True) + eps)


def _pick_tile(n, align, cap):
    """Largest tile <= cap that divides n and is a multiple of `align`;
    falls back to the full dim (block == full array dim is always legal)."""
    if n <= cap:
        return n
    t = (cap // align) * align
    while t >= align:
        if n % t == 0:
            return t
        t -= align
    return n


def _vmem_limit(*block_nbytes):
    """Scoped-VMEM request: double-buffered blocks + headroom, clamped."""
    total = 2 * sum(int(b) for b in block_nbytes)
    return int(min(max(total + (8 << 20), 32 << 20), 100 << 20))


# ----------------------------- Pallas kernels -------------------------------


def qkv_kernel(x_ref, w_ref, o_ref):
    """rmsnorm + QKV projection tile.  x:(1,Tt,C) fp32, w:(C,Nt) bf16 -> o:(1,Tt,Nt) fp32."""
    x = x_ref[0]                                           # (Tt, C) fp32
    xn = _rms(x).astype(jnp.bfloat16)
    o_ref[0] = jnp.dot(xn, w_ref[...], preferred_element_type=jnp.float32)


def attn_kernel(q_ref, k_ref, v_ref, cos_ref, sin_ref, o_ref, *, scale, half, use_roll):
    """Causal attention for one (batch, head) grid point.

    q/k/v : (1,1,T,D) fp32     cos/sin : (T,D) fp32 (sin has -sin in 2nd half)
    o     : (1,1,T,D) fp32
    """
    q = q_ref[0, 0]                                        # (T, D) fp32
    k = k_ref[0, 0]
    v = v_ref[0, 0]
    cosf = cos_ref[...]
    sins = sin_ref[...]

    def rope(z):
        if use_roll:
            swapped = pltpu.roll(z, shift=half, axis=1)    # XLU rotate, lane-aligned D
        else:
            swapped = jnp.concatenate([z[:, half:], z[:, :half]], axis=1)
        return z * cosf + swapped * sins

    qh = rope(q).astype(jnp.bfloat16)
    kh = rope(k).astype(jnp.bfloat16)

    s = jnp.einsum("qd,kd->qk", qh, kh,
                   preferred_element_type=jnp.float32) * scale      # (T, T) fp32
    T = s.shape[0]
    row = jax.lax.broadcasted_iota(jnp.int32, (T, T), 0)
    col = jax.lax.broadcasted_iota(jnp.int32, (T, T), 1)
    s = jnp.where(row >= col, s, -1e30)
    s = s - jnp.max(s, axis=-1, keepdims=True)
    p = jnp.exp(s)
    p = p / jnp.sum(p, axis=-1, keepdims=True)                      # fp32 softmax

    # TODO(synk): for long T, switch to flash-style KV tiling (online softmax) so the
    # (T,T) score tile does not grow quadratically (needed for v7x 64 MiB VMEM).
    o_ref[0, 0] = jnp.dot(p.astype(jnp.bfloat16), v.astype(jnp.bfloat16),
                          preferred_element_type=jnp.float32)


def post_kernel(x_ref, y_ref, wo_ref, wfc1_ref, wfc2_ref, wmp_ref, o_ref):
    """Attention out-proj + residual + rmsnorm + gated MLP + residual for a T-tile."""
    x = x_ref[0]                                           # (Tt, C) fp32 residual
    y = y_ref[0].astype(jnp.bfloat16)                      # attention output
    x = x + jnp.dot(y, wo_ref[...], preferred_element_type=jnp.float32)

    xn = _rms(x).astype(jnp.bfloat16)
    g = jnp.dot(xn, wfc1_ref[...], preferred_element_type=jnp.float32)   # (Tt, 2C)
    u = jnp.dot(xn, wfc2_ref[...], preferred_element_type=jnp.float32)
    h = (g * jax.nn.sigmoid(g)) * u                        # SiLU gate in fp32
    x = x + jnp.dot(h.astype(jnp.bfloat16), wmp_ref[...],
                    preferred_element_type=jnp.float32)
    o_ref[0] = x
    # TODO(synk): at large C, tile wo/wfc/wmp over a reduction/output grid axis so the
    # MLP weights stream instead of staying fully VMEM-resident (v7x 64 MiB budget).


def lm_head_kernel(x_ref, w_ref, o_ref):
    """Final rmsnorm + lm_head vocab tile: x:(B,C) fp32, w:(C,Vt) bf16 -> o:(B,Vt) fp32."""
    xn = _rms(x_ref[...]).astype(jnp.bfloat16)
    o_ref[...] = jnp.dot(xn, w_ref[...], preferred_element_type=jnp.float32)


# ------------------------------ JAX wrapper ----------------------------------


def gpt_forward(idx, params, *, n_head):
    """Mirrors GPT.forward(idx, targets=None, return_logits=True) -> logits (B, 1, V)."""
    x = jnp.take(params["wte"], idx, axis=0)               # (B, T, C) fp32 (glue gather)
    B, T, C = x.shape
    H = n_head
    D = C // H
    half = D // 2
    scale = 1.0 / (D ** 0.5)
    use_roll = (D % 128 == 0)                              # lane-aligned -> XLU roll

    # rotary tables, full head-dim width so the kernel needs only one rotate/concat
    inv_freq = 1.0 / (10000.0 ** (jnp.arange(0, D, 2, dtype=jnp.float32) / D))
    freqs = jnp.outer(jnp.arange(T, dtype=jnp.float32), inv_freq)   # (T, D/2)
    cos_full = jnp.concatenate([jnp.cos(freqs), jnp.cos(freqs)], axis=-1)    # (T, D)
    sin_signed = jnp.concatenate([jnp.sin(freqs), -jnp.sin(freqs)], axis=-1)  # (T, D)

    t_tile = _pick_tile(T, 8, 256)
    n_tile = _pick_tile(3 * C, 128, 1024)
    nT = T // t_tile
    nN = (3 * C) // n_tile

    f32 = 4
    bf16 = 2

    qkv_call = pl.pallas_call(
        qkv_kernel,
        grid=(B, nT, nN),
        in_specs=[
            pl.BlockSpec((1, t_tile, C), lambda b, t, n: (b, t, 0)),
            pl.BlockSpec((C, n_tile), lambda b, t, n: (0, n)),
        ],
        out_specs=pl.BlockSpec((1, t_tile, n_tile), lambda b, t, n: (b, t, n)),
        out_shape=jax.ShapeDtypeStruct((B, T, 3 * C), jnp.float32),
        compiler_params=pltpu.CompilerParams(
            dimension_semantics=("parallel", "parallel", "parallel"),
            vmem_limit_bytes=_vmem_limit(t_tile * C * f32,
                                         C * n_tile * bf16,
                                         t_tile * n_tile * f32)),
    )

    attn_call = pl.pallas_call(
        functools.partial(attn_kernel, scale=scale, half=half, use_roll=use_roll),
        grid=(B, H),
        in_specs=[
            pl.BlockSpec((1, 1, T, D), lambda b, h: (b, h, 0, 0)),
            pl.BlockSpec((1, 1, T, D), lambda b, h: (b, h, 0, 0)),
            pl.BlockSpec((1, 1, T, D), lambda b, h: (b, h, 0, 0)),
            pl.BlockSpec((T, D), lambda b, h: (0, 0)),
            pl.BlockSpec((T, D), lambda b, h: (0, 0)),
        ],
        out_specs=pl.BlockSpec((1, 1, T, D), lambda b, h: (b, h, 0, 0)),
        out_shape=jax.ShapeDtypeStruct((B, H, T, D), jnp.float32),
        compiler_params=pltpu.CompilerParams(
            dimension_semantics=("parallel", "parallel"),
            vmem_limit_bytes=_vmem_limit(4 * T * D * f32,
                                         2 * T * D * f32,
                                         T * T * f32)),
    )

    post_call = pl.pallas_call(
        post_kernel,
        grid=(B, nT),
        in_specs=[
            pl.BlockSpec((1, t_tile, C), lambda b, t: (b, t, 0)),
            pl.BlockSpec((1, t_tile, C), lambda b, t: (b, t, 0)),
            pl.BlockSpec((C, C), lambda b, t: (0, 0)),
            pl.BlockSpec((C, 2 * C), lambda b, t: (0, 0)),
            pl.BlockSpec((C, 2 * C), lambda b, t: (0, 0)),
            pl.BlockSpec((2 * C, C), lambda b, t: (0, 0)),
        ],
        out_specs=pl.BlockSpec((1, t_tile, C), lambda b, t: (b, t, 0)),
        out_shape=jax.ShapeDtypeStruct((B, T, C), jnp.float32),
        compiler_params=pltpu.CompilerParams(
            dimension_semantics=("parallel", "parallel"),
            vmem_limit_bytes=_vmem_limit(3 * t_tile * C * f32,
                                         (C * C + 4 * C * C + 2 * C * C) * bf16,
                                         2 * t_tile * 2 * C * f32)),
    )

    for layer in params["blocks"]:
        qkv = qkv_call(x, layer["wqkv"])                          # (B, T, 3C) fp32
        # head-layout split/transpose as plain-JAX glue between kernels
        qkv = qkv.reshape(B, T, 3, H, D).transpose(2, 0, 3, 1, 4)  # (3, B, H, T, D)
        y = attn_call(qkv[0], qkv[1], qkv[2], cos_full, sin_signed)  # (B, H, T, D)
        y = y.transpose(0, 2, 1, 3).reshape(B, T, C)              # (B, T, C)
        x = post_call(x, y, layer["wo"], layer["wfc1"], layer["wfc2"], layer["wmp"])

    # final rmsnorm + lm_head, last token only, batched over B, vocab tiled
    wlm = params["wlm"]                                           # (C, V) bf16
    V = wlm.shape[1]
    v_tile = _pick_tile(V, 128, 2048)
    x_last = x[:, -1, :]                                          # (B, C) glue slice

    head_call = pl.pallas_call(
        lm_head_kernel,
        grid=(V // v_tile,),
        in_specs=[
            pl.BlockSpec((B, C), lambda v: (0, 0)),
            pl.BlockSpec((C, v_tile), lambda v: (0, v)),
        ],
        out_specs=pl.BlockSpec((B, v_tile), lambda v: (0, v)),
        out_shape=jax.ShapeDtypeStruct((B, V), jnp.float32),
        compiler_params=pltpu.CompilerParams(
            dimension_semantics=("parallel",),
            vmem_limit_bytes=_vmem_limit(B * C * f32,
                                         C * v_tile * bf16,
                                         B * v_tile * f32)),
    )
    logits = head_call(x_last, wlm)                               # (B, V)
    return logits[:, None, :]                                     # (B, 1, V)


# --------------------------- parameter creation -------------------------------


def init_params(key, *, vocab_size, n_embd, n_layer, emb_std, base_std):
    """Deterministic init matching GPT.__init__.
    Linear weights stored transposed (in, out) and cast to bfloat16 for the MXU."""
    C = n_embd
    keys = jax.random.split(key, 1 + 5 * n_layer)
    k_iter = iter(keys)

    wte = emb_std * jax.random.normal(next(k_iter), (vocab_size, C), jnp.float32)

    proj_std = base_std * (n_layer * n_embd * 2) ** (-0.5)
    blocks = []
    for _ in range(n_layer):
        w_attn = base_std * C ** (-0.5) * jax.random.normal(next(k_iter), (3 * C, C), jnp.float32)
        w_oproj = proj_std * jax.random.normal(next(k_iter), (C, C), jnp.float32)
        w_fc1 = base_std * C ** (-0.5) * jax.random.normal(next(k_iter), (2 * C, C), jnp.float32)
        w_fc2 = base_std * C ** (-0.5) * jax.random.normal(next(k_iter), (2 * C, C), jnp.float32)
        w_mproj = proj_std * jax.random.normal(next(k_iter), (C, 2 * C), jnp.float32)
        blocks.append(dict(
            wqkv=w_attn.T.astype(jnp.bfloat16),     # (C, 3C)
            wo=w_oproj.T.astype(jnp.bfloat16),      # (C, C)
            wfc1=w_fc1.T.astype(jnp.bfloat16),      # (C, 2C)
            wfc2=w_fc2.T.astype(jnp.bfloat16),      # (C, 2C)
            wmp=w_mproj.T.astype(jnp.bfloat16),     # (2C, C)
        ))
    # lm_head.weight.data.zero_() -> logits are exactly zero by construction
    wlm = jnp.zeros((C, vocab_size), jnp.bfloat16)  # (in, out)
    # TODO(synk): on v7x, fp8 (e4m3) weight storage would halve VMEM/HBM traffic again.
    return dict(wte=wte, blocks=blocks, wlm=wlm)


# --------------------------------- main ---------------------------------------


if __name__ == "__main__":
    VOCAB = 64
    N_EMBD = 32
    N_HEAD = 4
    N_LAYER = 2
    B, T = 2, 8
    EMB_STD = 0.02
    BASE_STD = 0.02

    key = jax.random.PRNGKey(0)
    k_param, k_idx = jax.random.split(key)

    params = init_params(k_param, vocab_size=VOCAB, n_embd=N_EMBD,
                         n_layer=N_LAYER, emb_std=EMB_STD, base_std=BASE_STD)
    idx = jax.random.randint(k_idx, (B, T), 0, VOCAB, dtype=jnp.int32)

    forward = jax.jit(functools.partial(gpt_forward, n_head=N_HEAD))
    logits = forward(idx, params)
    logits = jax.block_until_ready(logits)

    assert logits.shape == (B, 1, VOCAB)
    assert logits.dtype == jnp.float32
    # lm_head is zero-initialized in the reference module -> logits must be all zeros.
    assert bool(jnp.all(logits == 0.0))

    # TODO(synk): training path (targets != None -> cross-entropy loss) not implemented;
    # only the inference path (targets=None, last-token logits) is kernelized.
    print("KERNEL_OK")
</pallas_src>

<mosaic_0001>
module attributes {stable_mosaic.version = 11 : i64} {
  func.func @qkv_kernel(%arg0: i32, %arg1: i32, %arg2: i32, %arg3: memref<1x8x32xf32, #tpu.memory_space<vmem>>, %arg4: memref<32x96xbf16, #tpu.memory_space<vmem>>, %arg5: memref<1x8x96xf32, #tpu.memory_space<vmem>>) attributes {dimension_semantics = [#tpu.dimension_semantics<parallel>, #tpu.dimension_semantics<parallel>, #tpu.dimension_semantics<parallel>], iteration_bounds = array<i64: 2, 1, 1>, scalar_prefetch = 0 : i64, scratch_operands = 0 : i64, tpu.core_type = #tpu.core_type<tc>, window_params = [{transform_indices = @transform_0, window_bounds = array<i64: 1, 8, 32>}, {transform_indices = @transform_1, window_bounds = array<i64: 32, 96>}, {transform_indices = @transform_2, window_bounds = array<i64: 1, 8, 96>}]} {
    %c0 = arith.constant 0 : index
    %c0_0 = arith.constant 0 : index
    %c0_1 = arith.constant 0 : index
    %0 = vector.load %arg3[%c0, %c0_0, %c0_1] : memref<1x8x32xf32, #tpu.memory_space<vmem>>, vector<1x8x32xf32>
    %1 = vector.shape_cast %0 : vector<1x8x32xf32> to vector<8x32xf32>
    %2 = arith.mulf %1, %1 : vector<8x32xf32>
    %cst = arith.constant dense<0.000000e+00> : vector<8xf32>
    %3 = vector.multi_reduction <add>, %2, %cst [1] : vector<8x32xf32> to vector<8xf32>
    %4 = vector.shape_cast %3 : vector<8xf32> to vector<8x1xf32>
    %cst_2 = arith.constant 3.200000e+01 : f32
    %5 = vector.broadcast %cst_2 : f32 to vector<8x1xf32>
    %6 = arith.divf %4, %5 : vector<8x1xf32>
    %cst_3 = arith.constant 9.99999997E-7 : f32
    %7 = vector.broadcast %cst_3 : f32 to vector<8x1xf32>
    %8 = arith.addf %6, %7 : vector<8x1xf32>
    %9 = math.rsqrt %8 : vector<8x1xf32>
    %10 = vector.broadcast %9 : vector<8x1xf32> to vector<8x32xf32>
    %11 = arith.mulf %1, %10 : vector<8x32xf32>
    %12 = arith.truncf %11 : vector<8x32xf32> to vector<8x32xbf16>
    %c0_4 = arith.constant 0 : index
    %c0_5 = arith.constant 0 : index
    %13 = vector.load %arg4[%c0_4, %c0_5] : memref<32x96xbf16, #tpu.memory_space<vmem>>, vector<32x96xbf16>
    %cst_6 = arith.constant dense<0.000000e+00> : vector<8x96xf32>
    %14 = tpu.matmul %12, %13, %cst_6 {dimension_numbers = #tpu.dot_dimension_numbers<[1], [0], [0], [1], [0, 0, 1, 1], [], []>} : vector<8x32xbf16>, vector<32x96xbf16>, vector<8x96xf32> -> vector<8x96xf32>
    %c0_7 = arith.constant 0 : index
    %c0_8 = arith.constant 0 : index
    %c0_9 = arith.constant 0 : index
    %15 = vector.load %arg5[%c0_7, %c0_8, %c0_9] : memref<1x8x96xf32, #tpu.memory_space<vmem>>, vector<1x8x96xf32>
    %16 = vector.shape_cast %15 : vector<1x8x96xf32> to vector<8x96xf32>
    %17 = vector.shape_cast %14 : vector<8x96xf32> to vector<1x8x96xf32>
    tpu.vector_store %arg5[%c0_7, %c0_8, %c0_9], %17 {strides = array<i32>} : memref<1x8x96xf32, #tpu.memory_space<vmem>>, vector<1x8x96xf32>,
    return
  }
  func.func @transform_0(%arg0: i32, %arg1: i32, %arg2: i32) -> (i32, i32, i32) {
    %c0_i32 = arith.constant 0 : i32
    %c0_i32_0 = arith.constant 0 : i32
    return %arg0, %arg1, %c0_i32 : i32, i32, i32
  }
  func.func @transform_1(%arg0: i32, %arg1: i32, %arg2: i32) -> (i32, i32) {
    %c0_i32 = arith.constant 0 : i32
    %c0_i32_0 = arith.constant 0 : i32
    return %c0_i32, %arg2 : i32, i32
  }
  func.func @transform_2(%arg0: i32, %arg1: i32, %arg2: i32) -> (i32, i32, i32) {
    %c0_i32 = arith.constant 0 : i32
    return %arg0, %arg1, %arg2 : i32, i32, i32
  }
}

module attributes {stable_mosaic.version = 11 : i64} {
  func.func @attn_kernel(%arg0: i32, %arg1: i32, %arg2: memref<1x1x8x8xf32, #tpu.memory_space<vmem>>, %arg3: memref<1x1x8x8xf32, #tpu.memory_space<vmem>>, %arg4: memref<1x1x8x8xf32, #tpu.memory_space<vmem>>, %arg5: memref<8x8xf32, #tpu.memory_space<vmem>>, %arg6: memref<8x8xf32, #tpu.memory_space<vmem>>, %arg7: memref<1x1x8x8xf32, #tpu.memory_space<vmem>>) attributes {dimension_semantics = [#tpu.dimension_semantics<parallel>, #tpu.dimension_semantics<parallel>], iteration_bounds = array<i64: 2, 4>, scalar_prefetch = 0 : i64, scratch_operands = 0 : i64, tpu.core_type = #tpu.core_type<tc>, window_params = [{transform_indices = @transform_0, window_bounds = array<i64: 1, 1, 8, 8>}, {transform_indices = @transform_1, window_bounds = array<i64: 1, 1, 8, 8>}, {transform_indices = @transform_2, window_bounds = array<i64: 1, 1, 8, 8>}, {pipeline_mode = #tpu.pipeline_mode<synchronous>, transform_indices = @transform_3, window_bounds = array<i64: 8, 8>}, {pipeline_mode = #tpu.pipeline_mode<synchronous>, transform_indices = @transform_4, window_bounds = array<i64: 8, 8>}, {transform_indices = @transform_5, window_bounds = array<i64: 1, 1, 8, 8>}]} {
    %c0 = arith.constant 0 : index
    %c0_0 = arith.constant 0 : index
    %c0_1 = arith.constant 0 : index
    %c0_2 = arith.constant 0 : index
    %0 = vector.load %arg2[%c0, %c0_0, %c0_1, %c0_2] : memref<1x1x8x8xf32, #tpu.memory_space<vmem>>, vector<1x1x8x8xf32>
    %1 = vector.shape_cast %0 : vector<1x1x8x8xf32> to vector<8x8xf32>
    %c0_3 = arith.constant 0 : index
    %c0_4 = arith.constant 0 : index
    %c0_5 = arith.constant 0 : index
    %c0_6 = arith.constant 0 : index
    %2 = vector.load %arg3[%c0_3, %c0_4, %c0_5, %c0_6] : memref<1x1x8x8xf32, #tpu.memory_space<vmem>>, vector<1x1x8x8xf32>
    %3 = vector.shape_cast %2 : vector<1x1x8x8xf32> to vector<8x8xf32>
    %c0_7 = arith.constant 0 : index
    %c0_8 = arith.constant 0 : index
    %c0_9 = arith.constant 0 : index
    %c0_10 = arith.constant 0 : index
    %4 = vector.load %arg4[%c0_7, %c0_8, %c0_9, %c0_10] : memref<1x1x8x8xf32, #tpu.memory_space<vmem>>, vector<1x1x8x8xf32>
    %5 = vector.shape_cast %4 : vector<1x1x8x8xf32> to vector<8x8xf32>
    %c0_11 = arith.constant 0 : index
    %c0_12 = arith.constant 0 : index
    %6 = vector.load %arg5[%c0_11, %c0_12] : memref<8x8xf32, #tpu.memory_space<vmem>>, vector<8x8xf32>
    %c0_13 = arith.constant 0 : index
    %c0_14 = arith.constant 0 : index
    %7 = vector.load %arg6[%c0_13, %c0_14] : memref<8x8xf32, #tpu.memory_space<vmem>>, vector<8x8xf32>
    %8 = vector.extract_strided_slice %1 {offsets = [0, 4], sizes = [8, 4], strides = [1, 1]} : vector<8x8xf32> to vector<8x4xf32>
    %9 = vector.extract_strided_slice %1 {offsets = [0, 0], sizes = [8, 4], strides = [1, 1]} : vector<8x8xf32> to vector<8x4xf32>
    %10 = tpu.concatenate %8, %9 in 1 : vector<8x4xf32>, vector<8x4xf32> -> vector<8x8xf32>
    %11 = arith.mulf %1, %6 : vector<8x8xf32>
    %12 = arith.mulf %10, %7 : vector<8x8xf32>
    %13 = arith.addf %11, %12 : vector<8x8xf32>
    %14 = arith.truncf %13 : vector<8x8xf32> to vector<8x8xbf16>
    %15 = vector.extract_strided_slice %3 {offsets = [0, 4], sizes = [8, 4], strides = [1, 1]} : vector<8x8xf32> to vector<8x4xf32>
    %16 = vector.extract_strided_slice %3 {offsets = [0, 0], sizes = [8, 4], strides = [1, 1]} : vector<8x8xf32> to vector<8x4xf32>
    %17 = tpu.concatenate %15, %16 in 1 : vector<8x4xf32>, vector<8x4xf32> -> vector<8x8xf32>
    %18 = arith.mulf %3, %6 : vector<8x8xf32>
    %19 = arith.mulf %17, %7 : vector<8x8xf32>
    %20 = arith.addf %18, %19 : vector<8x8xf32>
    %21 = arith.truncf %20 : vector<8x8xf32> to vector<8x8xbf16>
    "tpu.trace_start"() <{level = 10 : i32, message = "qd,kd->qk"}> : () -> ()
    %cst = arith.constant dense<0.000000e+00> : vector<8x8xf32>
    %22 = tpu.matmul %14, %21, %cst {dimension_numbers = #tpu.dot_dimension_numbers<[1], [1], [0], [0], [0, 0, 1, 0], [], []>} : vector<8x8xbf16>, vector<8x8xbf16>, vector<8x8xf32> -> vector<8x8xf32>
    "tpu.trace_stop"() : () -> ()
    %cst_15 = arith.constant 0.353553385 : f32
    %23 = vector.broadcast %cst_15 : f32 to vector<8x8xf32>
    %24 = arith.mulf %22, %23 : vector<8x8xf32>
    %25 = tpu.iota {dimensions = array<i32: 0>} : vector<8x8xi32>
    %26 = tpu.iota {dimensions = array<i32: 1>} : vector<8x8xi32>
    %27 = arith.cmpi sge, %25, %26 : vector<8x8xi32>
    %cst_16 = arith.constant -1.000000e+30 : f32
    %28 = vector.broadcast %cst_16 : f32 to vector<8x8xf32>
    %29 = arith.select %27, %24, %28 : vector<8x8xi1>, vector<8x8xf32>
    %cst_17 = arith.constant dense<0xFF800000> : vector<8xf32>
    %30 = vector.multi_reduction <maximumf>, %29, %cst_17 [1] : vector<8x8xf32> to vector<8xf32>
    %31 = vector.shape_cast %30 : vector<8xf32> to vector<8x1xf32>
    %32 = vector.broadcast %31 : vector<8x1xf32> to vector<8x8xf32>
    %33 = arith.subf %29, %32 : vector<8x8xf32>
    %34 = math.exp %33 : vector<8x8xf32>
    %cst_18 = arith.constant dense<0.000000e+00> : vector<8xf32>
    %35 = vector.multi_reduction <add>, %34, %cst_18 [1] : vector<8x8xf32> to vector<8xf32>
    %36 = vector.shape_cast %35 : vector<8xf32> to vector<8x1xf32>
    %37 = vector.broadcast %36 : vector<8x1xf32> to vector<8x8xf32>
    %38 = arith.divf %34, %37 : vector<8x8xf32>
    %39 = arith.truncf %38 : vector<8x8xf32> to vector<8x8xbf16>
    %40 = arith.truncf %5 : vector<8x8xf32> to vector<8x8xbf16>
    %cst_19 = arith.constant dense<0.000000e+00> : vector<8x8xf32>
    %41 = tpu.matmul %39, %40, %cst_19 {dimension_numbers = #tpu.dot_dimension_numbers<[1], [0], [0], [1], [0, 0, 1, 1], [], []>} : vector<8x8xbf16>, vector<8x8xbf16>, vector<8x8xf32> -> vector<8x8xf32>
    %c0_20 = arith.constant 0 : index
    %c0_21 = arith.constant 0 : index
    %c0_22 = arith.constant 0 : index
    %c0_23 = arith.constant 0 : index
    %42 = vector.load %arg7[%c0_20, %c0_21, %c0_22, %c0_23] : memref<1x1x8x8xf32, #tpu.memory_space<vmem>>, vector<1x1x8x8xf32>
    %43 = vector.shape_cast %42 : vector<1x1x8x8xf32> to vector<8x8xf32>
    %44 = vector.shape_cast %41 : vector<8x8xf32> to vector<1x1x8x8xf32>
    tpu.vector_store %arg7[%c0_20, %c0_21, %c0_22, %c0_23], %44 {strides = array<i32>} : memref<1x1x8x8xf32, #tpu.memory_space<vmem>>, vector<1x1x8x8xf32>,
    return
  }
  func.func @transform_0(%arg0: i32, %arg1: i32) -> (i32, i32, i32, i32) {
    %c0_i32 = arith.constant 0 : i32
    %c0_i32_0 = arith.constant 0 : i32
    %c0_i32_1 = arith.constant 0 : i32
    return %arg0, %arg1, %c0_i32, %c0_i32_0 : i32, i32, i32, i32
  }
  func.func @transform_1(%arg0: i32, %arg1: i32) -> (i32, i32, i32, i32) {
    %c0_i32 = arith.constant 0 : i32
    %c0_i32_0 = arith.constant 0 : i32
    %c0_i32_1 = arith.constant 0 : i32
    return %arg0, %arg1, %c0_i32, %c0_i32_0 : i32, i32, i32, i32
  }
  func.func @transform_2(%arg0: i32, %arg1: i32) -> (i32, i32, i32, i32) {
    %c0_i32 = arith.constant 0 : i32
    %c0_i32_0 = arith.constant 0 : i32
    %c0_i32_1 = arith.constant 0 : i32
    return %arg0, %arg1, %c0_i32, %c0_i32_0 : i32, i32, i32, i32
  }
  func.func @transform_3(%arg0: i32, %arg1: i32) -> (i32, i32) {
    %c0_i32 = arith.constant 0 : i32
    %c0_i32_0 = arith.constant 0 : i32
    %c0_i32_1 = arith.constant 0 : i32
    return %c0_i32, %c0_i32_0 : i32, i32
  }
  func.func @transform_4(%arg0: i32, %arg1: i32) -> (i32, i32) {
    %c0_i32 = arith.constant 0 : i32
    %c0_i32_0 = arith.constant 0 : i32
    %c0_i32_1 = arith.constant 0 : i32
    return %c0_i32, %c0_i32_0 : i32, i32
  }
  func.func @transform_5(%arg0: i32, %arg1: i32) -> (i32, i32, i32, i32) {
    %c0_i32 = arith.constant 0 : i32
    %c0_i32_0 = arith.constant 0 : i32
    %c0_i32_1 = arith.constant 0 : i32
    return %arg0, %arg1, %c0_i32, %c0_i32_0 : i32, i32, i32, i32
  }
}

module attributes {stable_mosaic.version = 11 : i64} {
  func.func @post_kernel(%arg0: i32, %arg1: i32, %arg2: memref<1x8x32xf32, #tpu.memory_space<vmem>>, %arg3: memref<1x8x32xf32, #tpu.memory_space<vmem>>, %arg4: memref<32x32xbf16, #tpu.memory_space<vmem>>, %arg5: memref<32x64xbf16, #tpu.memory_space<vmem>>, %arg6: memref<32x64xbf16, #tpu.memory_space<vmem>>, %arg7: memref<64x32xbf16, #tpu.memory_space<vmem>>, %arg8: memref<1x8x32xf32, #tpu.memory_space<vmem>>) attributes {dimension_semantics = [#tpu.dimension_semantics<parallel>, #tpu.dimension_semantics<parallel>], iteration_bounds = array<i64: 2, 1>, scalar_prefetch = 0 : i64, scratch_operands = 0 : i64, tpu.core_type = #tpu.core_type<tc>, window_params = [{transform_indices = @transform_0, window_bounds = array<i64: 1, 8, 32>}, {transform_indices = @transform_1, window_bounds = array<i64: 1, 8, 32>}, {pipeline_mode = #tpu.pipeline_mode<synchronous>, transform_indices = @transform_2, window_bounds = array<i64: 32, 32>}, {pipeline_mode = #tpu.pipeline_mode<synchronous>, transform_indices = @transform_3, window_bounds = array<i64: 32, 64>}, {pipeline_mode = #tpu.pipeline_mode<synchronous>, transform_indices = @transform_4, window_bounds = array<i64: 32, 64>}, {pipeline_mode = #tpu.pipeline_mode<synchronous>, transform_indices = @transform_5, window_bounds = array<i64: 64, 32>}, {transform_indices = @transform_6, window_bounds = array<i64: 1, 8, 32>}]} {
    %c0 = arith.constant 0 : index
    %c0_0 = arith.constant 0 : index
    %c0_1 = arith.constant 0 : index
    %0 = vector.load %arg2[%c0, %c0_0, %c0_1] : memref<1x8x32xf32, #tpu.memory_space<vmem>>, vector<1x8x32xf32>
    %1 = vector.shape_cast %0 : vector<1x8x32xf32> to vector<8x32xf32>
    %c0_2 = arith.constant 0 : index
    %c0_3 = arith.constant 0 : index
    %c0_4 = arith.constant 0 : index
    %2 = vector.load %arg3[%c0_2, %c0_3, %c0_4] : memref<1x8x32xf32, #tpu.memory_space<vmem>>, vector<1x8x32xf32>
    %3 = vector.shape_cast %2 : vector<1x8x32xf32> to vector<8x32xf32>
    %4 = arith.truncf %3 : vector<8x32xf32> to vector<8x32xbf16>
    %c0_5 = arith.constant 0 : index
    %c0_6 = arith.constant 0 : index
    %5 = vector.load %arg4[%c0_5, %c0_6] : memref<32x32xbf16, #tpu.memory_space<vmem>>, vector<32x32xbf16>
    %cst = arith.constant dense<0.000000e+00> : vector<8x32xf32>
    %6 = tpu.matmul %4, %5, %cst {dimension_numbers = #tpu.dot_dimension_numbers<[1], [0], [0], [1], [0, 0, 1, 1], [], []>} : vector<8x32xbf16>, vector<32x32xbf16>, vector<8x32xf32> -> vector<8x32xf32>
    %7 = arith.addf %1, %6 : vector<8x32xf32>
    %8 = arith.mulf %7, %7 : vector<8x32xf32>
    %cst_7 = arith.constant dense<0.000000e+00> : vector<8xf32>
    %9 = vector.multi_reduction <add>, %8, %cst_7 [1] : vector<8x32xf32> to vector<8xf32>
    %10 = vector.shape_cast %9 : vector<8xf32> to vector<8x1xf32>
    %cst_8 = arith.constant 3.200000e+01 : f32
    %11 = vector.broadcast %cst_8 : f32 to vector<8x1xf32>
    %12 = arith.divf %10, %11 : vector<8x1xf32>
    %cst_9 = arith.constant 9.99999997E-7 : f32
    %13 = vector.broadcast %cst_9 : f32 to vector<8x1xf32>
    %14 = arith.addf %12, %13 : vector<8x1xf32>
    %15 = math.rsqrt %14 : vector<8x1xf32>
    %16 = vector.broadcast %15 : vector<8x1xf32> to vector<8x32xf32>
    %17 = arith.mulf %7, %16 : vector<8x32xf32>
    %18 = arith.truncf %17 : vector<8x32xf32> to vector<8x32xbf16>
    %c0_10 = arith.constant 0 : index
    %c0_11 = arith.constant 0 : index
    %19 = vector.load %arg5[%c0_10, %c0_11] : memref<32x64xbf16, #tpu.memory_space<vmem>>, vector<32x64xbf16>
    %cst_12 = arith.constant dense<0.000000e+00> : vector<8x64xf32>
    %20 = tpu.matmul %18, %19, %cst_12 {dimension_numbers = #tpu.dot_dimension_numbers<[1], [0], [0], [1], [0, 0, 1, 1], [], []>} : vector<8x32xbf16>, vector<32x64xbf16>, vector<8x64xf32> -> vector<8x64xf32>
    %c0_13 = arith.constant 0 : index
    %c0_14 = arith.constant 0 : index
    %21 = vector.load %arg6[%c0_13, %c0_14] : memref<32x64xbf16, #tpu.memory_space<vmem>>, vector<32x64xbf16>
    %cst_15 = arith.constant dense<0.000000e+00> : vector<8x64xf32>
    %22 = tpu.matmul %18, %21, %cst_15 {dimension_numbers = #tpu.dot_dimension_numbers<[1], [0], [0], [1], [0, 0, 1, 1], [], []>} : vector<8x32xbf16>, vector<32x64xbf16>, vector<8x64xf32> -> vector<8x64xf32>
    %23 = arith.negf %20 : vector<8x64xf32>
    %24 = math.exp %23 : vector<8x64xf32>
    %cst_16 = arith.constant 1.000000e+00 : f32
    %25 = vector.broadcast %cst_16 : f32 to vector<8x64xf32>
    %26 = arith.addf %25, %24 : vector<8x64xf32>
    %27 = arith.divf %25, %26 : vector<8x64xf32>
    %28 = arith.mulf %20, %27 : vector<8x64xf32>
    %29 = arith.mulf %28, %22 : vector<8x64xf32>
    %30 = arith.truncf %29 : vector<8x64xf32> to vector<8x64xbf16>
    %c0_17 = arith.constant 0 : index
    %c0_18 = arith.constant 0 : index
    %31 = vector.load %arg7[%c0_17, %c0_18] : memref<64x32xbf16, #tpu.memory_space<vmem>>, vector<64x32xbf16>
    %cst_19 = arith.constant dense<0.000000e+00> : vector<8x32xf32>
    %32 = tpu.matmul %30, %31, %cst_19 {dimension_numbers = #tpu.dot_dimension_numbers<[1], [0], [0], [1], [0, 0, 1, 1], [], []>} : vector<8x64xbf16>, vector<64x32xbf16>, vector<8x32xf32> -> vector<8x32xf32>
    %33 = arith.addf %7, %32 : vector<8x32xf32>
    %c0_20 = arith.constant 0 : index
    %c0_21 = arith.constant 0 : index
    %c0_22 = arith.constant 0 : index
    %34 = vector.load %arg8[%c0_20, %c0_21, %c0_22] : memref<1x8x32xf32, #tpu.memory_space<vmem>>, vector<1x8x32xf32>
    %35 = vector.shape_cast %34 : vector<1x8x32xf32> to vector<8x32xf32>
    %36 = vector.shape_cast %33 : vector<8x32xf32> to vector<1x8x32xf32>
    tpu.vector_store %arg8[%c0_20, %c0_21, %c0_22], %36 {strides = array<i32>} : memref<1x8x32xf32, #tpu.memory_space<vmem>>, vector<1x8x32xf32>,
    return
  }
  func.func @transform_0(%arg0: i32, %arg1: i32) -> (i32, i32, i32) {
    %c0_i32 = arith.constant 0 : i32
    %c0_i32_0 = arith.constant 0 : i32
    return %arg0, %arg1, %c0_i32 : i32, i32, i32
  }
  func.func @transform_1(%arg0: i32, %arg1: i32) -> (i32, i32, i32) {
    %c0_i32 = arith.constant 0 : i32
    %c0_i32_0 = arith.constant 0 : i32
    return %arg0, %arg1, %c0_i32 : i32, i32, i32
  }
  func.func @transform_2(%arg0: i32, %arg1: i32) -> (i32, i32) {
    %c0_i32 = arith.constant 0 : i32
    %c0_i32_0 = arith.constant 0 : i32
    %c0_i32_1 = arith.constant 0 : i32
    return %c0_i32, %c0_i32_0 : i32, i32
  }
  func.func @transform_3(%arg0: i32, %arg1: i32) -> (i32, i32) {
    %c0_i32 = arith.constant 0 : i32
    %c0_i32_0 = arith.constant 0 : i32
    %c0_i32_1 = arith.constant 0 : i32
    return %c0_i32, %c0_i32_0 : i32, i32
  }
  func.func @transform_4(%arg0: i32, %arg1: i32) -> (i32, i32) {
    %c0_i32 = arith.constant 0 : i32
    %c0_i32_0 = arith.constant 0 : i32
    %c0_i32_1 = arith.constant 0 : i32
    return %c0_i32, %c0_i32_0 : i32, i32
  }
  func.func @transform_5(%arg0: i32, %arg1: i32) -> (i32, i32) {
    %c0_i32 = arith.constant 0 : i32
    %c0_i32_0 = arith.constant 0 : i32
    %c0_i32_1 = arith.constant 0 : i32
    return %c0_i32, %c0_i32_0 : i32, i32
  }
  func.func @transform_6(%arg0: i32, %arg1: i32) -> (i32, i32, i32) {
    %c0_i32 = arith.constant 0 : i32
    %c0_i32_0 = arith.constant 0 : i32
    return %arg0, %arg1, %c0_i32 : i32, i32, i32
  }
}

module attributes {stable_mosaic.version = 11 : i64} {
  func.func @lm_head_kernel(%arg0: i32, %arg1: memref<2x32xf32, #tpu.memory_space<vmem>>, %arg2: memref<32x64xbf16, #tpu.memory_space<vmem>>, %arg3: memref<2x64xf32, #tpu.memory_space<vmem>>) attributes {dimension_semantics = [#tpu.dimension_semantics<parallel>], iteration_bounds = array<i64: 1>, scalar_prefetch = 0 : i64, scratch_operands = 0 : i64, tpu.core_type = #tpu.core_type<tc>, window_params = [{pipeline_mode = #tpu.pipeline_mode<synchronous>, transform_indices = @transform_0, window_bounds = array<i64: 2, 32>}, {transform_indices = @transform_1, window_bounds = array<i64: 32, 64>}, {transform_indices = @transform_2, window_bounds = array<i64: 2, 64>}]} {
    %c0 = arith.constant 0 : index
    %c0_0 = arith.constant 0 : index
    %0 = vector.load %arg1[%c0, %c0_0] : memref<2x32xf32, #tpu.memory_space<vmem>>, vector<2x32xf32>
    %1 = arith.mulf %0, %0 : vector<2x32xf32>
    %cst = arith.constant dense<0.000000e+00> : vector<2xf32>
    %2 = vector.multi_reduction <add>, %1, %cst [1] : vector<2x32xf32> to vector<2xf32>
    %3 = vector.shape_cast %2 : vector<2xf32> to vector<2x1xf32>
    %cst_1 = arith.constant 3.200000e+01 : f32
    %4 = vector.broadcast %cst_1 : f32 to vector<2x1xf32>
    %5 = arith.divf %3, %4 : vector<2x1xf32>
    %cst_2 = arith.constant 9.99999997E-7 : f32
    %6 = vector.broadcast %cst_2 : f32 to vector<2x1xf32>
    %7 = arith.addf %5, %6 : vector<2x1xf32>
    %8 = math.rsqrt %7 : vector<2x1xf32>
    %9 = vector.broadcast %8 : vector<2x1xf32> to vector<2x32xf32>
    %10 = arith.mulf %0, %9 : vector<2x32xf32>
    %11 = arith.truncf %10 : vector<2x32xf32> to vector<2x32xbf16>
    %c0_3 = arith.constant 0 : index
    %c0_4 = arith.constant 0 : index
    %12 = vector.load %arg2[%c0_3, %c0_4] : memref<32x64xbf16, #tpu.memory_space<vmem>>, vector<32x64xbf16>
    %cst_5 = arith.constant dense<0.000000e+00> : vector<2x64xf32>
    %13 = tpu.matmul %11, %12, %cst_5 {dimension_numbers = #tpu.dot_dimension_numbers<[1], [0], [0], [1], [0, 0, 1, 1], [], []>} : vector<2x32xbf16>, vector<32x64xbf16>, vector<2x64xf32> -> vector<2x64xf32>
    %c0_6 = arith.constant 0 : index
    %c0_7 = arith.constant 0 : index
    %14 = vector.load %arg3[%c0_6, %c0_7] : memref<2x64xf32, #tpu.memory_space<vmem>>, vector<2x64xf32>
    tpu.vector_store %arg3[%c0_6, %c0_7], %13 {strides = array<i32>} : memref<2x64xf32, #tpu.memory_space<vmem>>, vector<2x64xf32>,
    return
  }
  func.func @transform_0(%arg0: i32) -> (i32, i32) {
    %c0_i32 = arith.constant 0 : i32
    %c0_i32_0 = arith.constant 0 : i32
    %c0_i32_1 = arith.constant 0 : i32
    return %c0_i32, %c0_i32_0 : i32, i32
  }
  func.func @transform_1(%arg0: i32) -> (i32, i32) {
    %c0_i32 = arith.constant 0 : i32
    %c0_i32_0 = arith.constant 0 : i32
    return %c0_i32, %arg0 : i32, i32
  }
  func.func @transform_2(%arg0: i32) -> (i32, i32) {
    %c0_i32 = arith.constant 0 : i32
    %c0_i32_0 = arith.constant 0 : i32
    return %c0_i32, %arg0 : i32, i32
  }
}

</mosaic_0001>

<llo_original>
// kernel: gpt_forward.7
$region0: #{gpt_forward.7}
  #allocation0 [shape = 'u32[]', space=smem, size = 0x4, offset = 0x4, fixed_abs, tag = 'smem constant byte address 0x4 - core index']
  #allocation1 [shape = 'u32[72,128]{1,0:T(1,128)}', space=vmem, size = 0x9000, scoped, tag = 'internal scratch']
  %s0 = inlined_call_operand.vmem [shape: f32[2,8,32], index: 0, kind: input, shape index: {}]
  %s1 = inlined_call_operand.vmem [shape: bf16[32,96], index: 1, kind: input, shape index: {}]
  %s2 = inlined_call_operand.vmem [shape: f32[2,8,96], index: 2, kind: output, shape index: {}]
  %s3 = sld [smem:[#allocation0]]
  $region41: #{gpt_forward.7} parent=0
    _
  %s5 = ssub.s32 1, %s3
  %s6 = scalar_select 0, %s5, %s3
  loop: start=0, step=1, limit=4
  $region2: #{gpt_forward.7} parent=0 // loop_pre_header
    _
  $region3: #{gpt_forward.7} parent=0 // loop_header
    %s8 = sphi 0, %s12
    %p9 = scmp.ge.s32.totalorder %s8, 4
    %s15 = sphi 0, %s34
    %s16 = sphi 0, %s30
    %s17 = sphi 0, %s26
    %s18 = sphi 0, %s15
    %s19 = sphi 0, %s16
    %s20 = sphi 0, %s17
    %s21 = sphi 0, %s18
    %s22 = sphi 0, %s19
    %s23 = sphi 0, %s20
    %s39 = sphi 0, %s41
    %s42 = sphi 0, %s39
    %s43 = sphi 0, %s42
    %s59 = sphi 0, %s43
    %s65 = sphi 0, %s67
    %s68 = sphi 0, %s65
    %s69 = sphi 0, %s68
    %s85 = sphi 0, %s69
    %s95 = sphi 0, %s97
    %s98 = sphi 0, %s95
    %s99 = sphi 0, %s98
    %s115 = sphi 0, %s99
  $region4: #{gpt_forward.7} parent=0 // loop_header_branch
    %11 = sbr.rel (%p9) target = $region8
  $region5: #{gpt_forward.7} parent=0 // loop_body
    %s13 = ssub.s32 %s8, 1
    %s14 = ssub.s32 %s8, 2
    %s24 = sadd.s32 1, %s17
    %p25 = scmp.ge.s32.totalorder %s24, 1
    %s26 = scalar_select %p25, 0, %s24
    %s27 = sadd.s32 1, %s16
    %s28 = scalar_select %p25, %s27, %s16
    %p29 = scmp.ge.s32.totalorder %s28, 1
    %s30 = scalar_select %p29, 0, %s28
    %s31 = sadd.s32 1, %s15
    %s32 = scalar_select %p29, %s31, %s15
    %p33 = scmp.ge.s32.totalorder %s32, 2
    %s34 = scalar_select %p33, 0, %s32
    %s35 = ssub.s32 %s15, %s34
    %s36 = ssub.s32 %s16, %s30
    %s37 = sor.u32 %s35, %s36
    %p38 = scmp.eq.s32.totalorder %s37, 0
    %s40 = sadd.s32 %s39, 1
    %s41 = scalar_select %p38, %s39, %s40
    %p44 = pneg %p38
    %p45 = scmp.eq.s32.totalorder %s8, 1
    %p46 = por %p44, %p45
    %p47 = scmp.ne.s32.totalorder %s39, %s42
    %p48 = scmp.eq.s32.totalorder %s8, 0
    %p49 = por %p47, %p48
    %p50 = scmp.ne.s32.totalorder %s39, %s42
    %p51 = scmp.eq.s32.totalorder %s13, 1
    %p52 = por %p50, %p51
    %p53 = scmp.ne.s32.totalorder %s42, %s43
    %p54 = scmp.eq.s32.totalorder %s13, 0
    %p55 = por %p53, %p54
    %p56 = scmp.ne.s32.totalorder %s42, %s43
    %p57 = scmp.eq.s32.totalorder %s14, 1
    %p58 = por %p56, %p57
    %p60 = scmp.ne.s32.totalorder %s43, %s59
    %p61 = scmp.eq.s32.totalorder %s14, 0
    %p62 = por %p60, %p61
    %s63 = ssub.s32 %s17, %s26
    %p64 = scmp.eq.s32.totalorder %s63, 0
    %s66 = sadd.s32 %s65, 1
    %s67 = scalar_select %p64, %s65, %s66
    %p70 = pneg %p64
    %p71 = scmp.eq.s32.totalorder %s8, 1
    %p72 = por %p70, %p71
    %p73 = scmp.ne.s32.totalorder %s65, %s68
    %p74 = scmp.eq.s32.totalorder %s8, 0
    %p75 = por %p73, %p74
    %p76 = scmp.ne.s32.totalorder %s65, %s68
    %p77 = scmp.eq.s32.totalorder %s13, 1
    %p78 = por %p76, %p77
    %p79 = scmp.ne.s32.totalorder %s68, %s69
    %p80 = scmp.eq.s32.totalorder %s13, 0
    %p81 = por %p79, %p80
    %p82 = scmp.ne.s32.totalorder %s68, %s69
    %p83 = scmp.eq.s32.totalorder %s14, 1
    %p84 = por %p82, %p83
    %p86 = scmp.ne.s32.totalorder %s69, %s85
    %p87 = scmp.eq.s32.totalorder %s14, 0
    %p88 = por %p86, %p87
    %s89 = ssub.s32 %s15, %s34
    %s90 = ssub.s32 %s16, %s30
    %s91 = sor.u32 %s89, %s90
    %s92 = ssub.s32 %s17, %s26
    %s93 = sor.u32 %s91, %s92
    %p94 = scmp.eq.s32.totalorder %s93, 0
    %s96 = sadd.s32 %s95, 1
    %s97 = scalar_select %p94, %s95, %s96
    %p100 = pneg %p94
    %p101 = scmp.eq.s32.totalorder %s8, 1
    %p102 = por %p100, %p101
    %p103 = scmp.ne.s32.totalorder %s95, %s98
    %p104 = scmp.eq.s32.totalorder %s8, 0
    %p105 = por %p103, %p104
    %p106 = scmp.ne.s32.totalorder %s95, %s98
    %p107 = scmp.eq.s32.totalorder %s13, 1
    %p108 = por %p106, %p107
    %p109 = scmp.ne.s32.totalorder %s98, %s99
    %p110 = scmp.eq.s32.totalorder %s13, 0
    %p111 = por %p109, %p110
    %p112 = scmp.ne.s32.totalorder %s98, %s99
    %p113 = scmp.eq.s32.totalorder %s14, 1
    %p114 = por %p112, %p113
    %p116 = scmp.ne.s32.totalorder %s99, %s115
    %p117 = scmp.eq.s32.totalorder %s14, 0
    %p118 = por %p116, %p117
    %p119 = scmp.le.s32.totalorder 1, %s8
    %p120 = scmp.lt.s32.totalorder %s8, 3
    %p121 = pnand %p119, %p120
    %p122 = pneg %p121
    // Predicated region
    $region9: #{gpt_forward.7} parent=5 // pred_check
      _
    $region10: #{gpt_forward.7} parent=5 // pred_check_branch
      %124 = sbr.rel (%p121) target = $region12
    $region11: #{gpt_forward.7} parent=5 // pred_region
      %s125 = ssub.s32 %s8, 1
      // Predicated region
      $region13: #{gpt_forward.7} parent=11 // pred_check
        %p126 = pneg %p81
      $region14: #{gpt_forward.7} parent=11 // pred_check_branch
        %128 = sbr.rel (%p126) target = $region16
      $region15: #{gpt_forward.7} parent=11 // pred_region
        %p129 = scmp.lt.s32.totalorder %s20, 0
        %s130 = scalar_select %p129, %s20, 0
        %s131 = smul.addr %s130, 4
        %s132 = scalar_lea.vmem %s1, %s131
      $region16: #{gpt_forward.7} parent=11 // pred_fallthru
        _
    $region12: #{gpt_forward.7} parent=5 // pred_fallthru
      _
    %p133 = scmp.lt.s32.totalorder %s8, 2
    // Predicated region
    $region17: #{gpt_forward.7} parent=5 // pred_check
      %p134 = pneg %p133
    $region18: #{gpt_forward.7} parent=5 // pred_check_branch
      %136 = sbr.rel (%p134) target = $region20
    $region19: #{gpt_forward.7} parent=5 // pred_region
      // Predicated region
      $region21: #{gpt_forward.7} parent=19 // pred_check
        %p137 = pneg %p49
      $region22: #{gpt_forward.7} parent=19 // pred_check_branch
        %139 = sbr.rel (%p137) target = $region24
      $region23: #{gpt_forward.7} parent=19 // pred_region
        %p140 = scmp.lt.s32.totalorder %s15, 1
        %s141 = scalar_select %p140, %s15, 1
        %p142 = scmp.lt.s32.totalorder %s16, 0
        %s143 = scalar_select %p142, %s16, 0
        %s144 = sadd.s32 %s143, %s141
        %s145 = smul.addr %s144, 8
        %s146 = scalar_lea.vmem %s0, %s145
      $region24: #{gpt_forward.7} parent=19 // pred_fallthru
        _
    $region20: #{gpt_forward.7} parent=5 // pred_fallthru
      _
    %p147 = scmp.le.s32.totalorder 1, %s8
    %p148 = scmp.lt.s32.totalorder %s8, 3
    %p149 = pnand %p147, %p148
    %p150 = pneg %p149
    // Predicated region
    $region25: #{gpt_forward.7} parent=5 // pred_check
      _
    $region26: #{gpt_forward.7} parent=5 // pred_check_branch
      %152 = sbr.rel (%p149) target = $region28
    $region27: #{gpt_forward.7} parent=5 // pred_region
      %s153 = ssub.s32 %s8, 1
      %p154 = scmp.lt.s32.totalorder %s18, 1
      %s155 = scalar_select %p154, %s18, 1
      %p156 = scmp.lt.s32.totalorder %s19, 0
      %s157 = scalar_select %p156, %s19, 0
      %s158 = sadd.s32 %s157, %s155
      %s159 = smul.addr %s158, 8
      %s160 = scalar_lea.vmem %s0, %s159
      %p161 = pneg %p55
      %p162 = pneg %p52
      %p163 = scmp.lt.s32.totalorder %s20, 0
      %s164 = scalar_select %p163, %s20, 0
      %s165 = smul.addr %s164, 4
      %s166 = scalar_lea.vmem %s1, %s165
      %p167 = pneg %p81
      %p168 = pneg %p78
      %p169 = pneg %p111
      %p170 = pneg %p108
      %p171 = scmp.lt.s32.totalorder %s18, 1
      %s172 = scalar_select %p171, %s18, 1
      %p173 = scmp.lt.s32.totalorder %s19, 0
      %s174 = scalar_select %p173, %s19, 0
      %p175 = scmp.lt.s32.totalorder %s20, 0
      %s176 = scalar_select %p175, %s20, 0
      %s177 = sadd.s32 %s176, %s174
      %s178 = sadd.s32 %s177, %s172
      %s179 = smul.addr %s178, 8
      %s180 = scalar_lea.vmem %s2, %s179
      %p181 = scmp.lt.s32.totalorder %s18, 1
      %s182 = scalar_select %p181, %s18, 1
      %p183 = scmp.lt.s32.totalorder %s19, 0
      %s184 = scalar_select %p183, %s19, 0
      %s185 = sadd.s32 %s184, %s182
      %s186 = smul.addr %s185, 8
      %s187 = scalar_lea.vmem %s0, %s186
      %p188 = scmp.lt.s32.totalorder %s20, 0
      %s189 = scalar_select %p188, %s20, 0
      %s190 = smul.addr %s189, 4
      %s191 = scalar_lea.vmem %s1, %s190
      %p192 = scmp.lt.s32.totalorder %s18, 1
      %s193 = scalar_select %p192, %s18, 1
      %p194 = scmp.lt.s32.totalorder %s19, 0
      %s195 = scalar_select %p194, %s19, 0
      %p196 = scmp.lt.s32.totalorder %s20, 0
      %s197 = scalar_select %p196, %s20, 0
      %s198 = sadd.s32 %s197, %s195
      %s199 = sadd.s32 %s198, %s193
      %s200 = smul.addr %s199, 8
      %s201 = scalar_lea.vmem %s2, %s200
      %v203 = vld [vmem:[%s187] sm:$0xff]
      %v204 = vmul.f32 %v203, %v203
      %vm205 = vcmask 261120
      %v206 = vsel %vm205, %v204, 0.0
      %207 = vadd.xlane.f32.xlu0 %v206
      %v208 = vpop.xlane.xlu0 %207
      %v209 = vrcp.pop 32.0
      %v210 = vmul.f32 32.0, %v209
      %v211 = vsub.f32 1.0, %v210
      %v212 = vmul.f32 %v209, %v211
      %v213 = vadd.f32 %v209, %v212
      %vm214 = vweird.f32 %v209
      %v215 = vsel %vm214, %v209, %v213
      %v216 = vmul.f32 %v208, %v215
      %v217 = vadd.f32 %v216, 1e-06
      %v218 = vrsqrt.pop %v217
      %v219 = vmul.f32 %v218, %v217
      %v220 = vmul.f32 %v219, %v218
      %v221 = vmul.f32 0.5, %v220
      %v222 = vsub.f32 1.5, %v221
      %v223 = vmul.f32 %v218, %v222
      %vm224 = vweird.f32 %v217
      %vm225 = vweird.f32 %v218
      %vm226 = vmor %vm224, %vm225
      %v227 = vsel %vm226, %v218, %v223
      %v228 = vmul.f32 %v203, %v227
      %v229 = vpack.c.bf16 %v228, %v228
      %v230 = vld [vmem:[%s191] sm:$0xf]
      %v231 = vld [vmem:[%s191 + $0x4] sm:$0xf]
      %v232 = vld [vmem:[%s191 + $0x8] sm:$0xf]
      %v233 = vld [vmem:[%s191 + $0xc] sm:$0xf]
      %v238 = vunpack.c.l.b16 %v230
      %v239 = vunpack.c.l.b16 %v231
      %v240 = vunpack.c.l.b16 %v232
      %v241 = vunpack.c.l.b16 %v233
      %v242 = vpack.c.b16 %v239, %v238
      %v243 = vpack.c.b16 %v241, %v240
      %v247 = vsel %vm205, %v229, 0
      %249 = vmatpush.bf16.msra.mxu0 0
      %250 = vmatpush.bf16.msra.mxu0 0
      %251 = vmatpush.bf16.msra.mxu0 0
      %252 = vmatpush.bf16.msra.mxu0 0
      %253 = vmatpush.bf16.msra.mxu0 0
      %254 = vmatpush.bf16.msra.mxu0 0
      %255 = vmatpush.bf16.msra.mxu0 %v243
      %256 = vmatpush.bf16.msra.mxu0 %v242
      %257 = vmatmul.bf16.gmra.mxu0 %v247
      %v258 = vpop.f32.mrf.mxu0
      %v259 = vadd.f32 0.0, %v258
      %v260 = vpop.f32.mrf.mxu0
      %261 = vdwg.mxu0
      %vm262 = vcmask 785408
      %263 = vst.msk [vmem:[%s201] sm:$0xff] %vm262, %v259
      %p264 = scmp.lt.s32.totalorder %s18, 1
      %s265 = scalar_select %p264, %s18, 1
      %p266 = scmp.lt.s32.totalorder %s19, 0
      %s267 = scalar_select %p266, %s19, 0
      %p268 = scmp.lt.s32.totalorder %s20, 0
      %s269 = scalar_select %p268, %s20, 0
      %s270 = sadd.s32 %s269, %s267
      %s271 = sadd.s32 %s270, %s265
      %s272 = smul.addr %s271, 8
      %s273 = scalar_lea.vmem %s2, %s272
      // Predicated region
      $region29: #{gpt_forward.7} parent=27 // pred_check
        %p274 = pneg %p108
      $region30: #{gpt_forward.7} parent=27 // pred_check_branch
        %276 = sbr.rel (%p274) target = $region32
      $region31: #{gpt_forward.7} parent=27 // pred_region
        _
      $region32: #{gpt_forward.7} parent=27 // pred_fallthru
        _
    $region28: #{gpt_forward.7} parent=5 // pred_fallthru
      _
    %p277 = scmp.le.s32.totalorder 2, %s8
    // Predicated region
    $region33: #{gpt_forward.7} parent=5 // pred_check
      %p278 = pneg %p277
    $region34: #{gpt_forward.7} parent=5 // pred_check_branch
      %280 = sbr.rel (%p278) target = $region36
    $region35: #{gpt_forward.7} parent=5 // pred_region
      %s281 = ssub.s32 %s8, 2
      // Predicated region
      $region37: #{gpt_forward.7} parent=35 // pred_check
        %p282 = pneg %p114
      $region38: #{gpt_forward.7} parent=35 // pred_check_branch
        %284 = sbr.rel (%p282) target = $region40
      $region39: #{gpt_forward.7} parent=35 // pred_region
        %p285 = scmp.lt.s32.totalorder %s21, 1
        %s286 = scalar_select %p285, %s21, 1
        %p287 = scmp.lt.s32.totalorder %s22, 0
        %s288 = scalar_select %p287, %s22, 0
        %p289 = scmp.lt.s32.totalorder %s23, 0
        %s290 = scalar_select %p289, %s23, 0
        %s291 = sadd.s32 %s290, %s288
        %s292 = sadd.s32 %s291, %s286
        %s293 = smul.addr %s292, 8
        %s294 = scalar_lea.vmem %s2, %s293
      $region40: #{gpt_forward.7} parent=35 // pred_fallthru
        _
    $region36: #{gpt_forward.7} parent=5 // pred_fallthru
      _
  $region6: #{gpt_forward.7} parent=0 // loop_footer
    %s12 = sadd.s32 1, %s8
  $region7: #{gpt_forward.7} parent=0 // loop_footer_branch
    %7 = sbr.rel target = $region3
  $region8: #{gpt_forward.7} parent=0 // loop_exit
    _

// kernel: gpt_forward.8
$region0: #{gpt_forward.8}
  #allocation0 [shape = 'u32[]', space=smem, size = 0x4, offset = 0x4, fixed_abs, tag = 'smem constant byte address 0x4 - core index']
  #allocation1 [shape = 'u32[72,128]{1,0:T(1,128)}', space=vmem, size = 0x9000, scoped, tag = 'internal scratch']
  %s0 = inlined_call_operand.vmem [shape: f32[2,4,8,8], index: 0, kind: input, shape index: {}]
  %s1 = inlined_call_operand.vmem [shape: f32[2,4,8,8], index: 1, kind: input, shape index: {}]
  %s2 = inlined_call_operand.vmem [shape: f32[2,4,8,8], index: 2, kind: input, shape index: {}]
  %s3 = inlined_call_operand.vmem [shape: f32[8,8], index: 3, kind: input, shape index: {}]
  %s4 = inlined_call_operand.vmem [shape: f32[8,8], index: 4, kind: input, shape index: {}]
  %s5 = inlined_call_operand.vmem [shape: f32[2,4,8,8], index: 5, kind: output, shape index: {}]
  %s6 = sld [smem:[#allocation0]]
  $region53: #{gpt_forward.8} parent=0
    _
  %s8 = ssub.s32 1, %s6
  %s9 = scalar_select 0, %s8, %s6
  loop: start=0, step=1, limit=10
  $region2: #{gpt_forward.8} parent=0 // loop_pre_header
    _
  $region3: #{gpt_forward.8} parent=0 // loop_header
    %s11 = sphi 0, %s15
    %p12 = scmp.ge.s32.totalorder %s11, 10
    %s18 = sphi 0, %s30
    %s19 = sphi 0, %s26
    %s20 = sphi 0, %s18
    %s21 = sphi 0, %s19
    %s22 = sphi 0, %s20
    %s23 = sphi 0, %s21
    %s35 = sphi 0, %s37
    %s38 = sphi 0, %s35
    %s39 = sphi 0, %s38
    %s55 = sphi 0, %s39
    %s63 = sphi 0, %s65
    %s66 = sphi 0, %s63
    %s67 = sphi 0, %s66
    %s83 = sphi 0, %s67
    %s91 = sphi 0, %s93
    %s94 = sphi 0, %s91
    %s95 = sphi 0, %s94
    %s111 = sphi 0, %s95
    %s115 = sphi 0, %s115
    %s117 = sphi 0, %s115
    %s118 = sphi 0, %s117
    %s132 = sphi 0, %s118
    %s136 = sphi 0, %s136
    %s138 = sphi 0, %s136
    %s139 = sphi 0, %s138
    %s153 = sphi 0, %s139
    %s161 = sphi 0, %s163
    %s164 = sphi 0, %s161
    %s165 = sphi 0, %s164
    %s181 = sphi 0, %s165
  $region4: #{gpt_forward.8} parent=0 // loop_header_branch
    %14 = sbr.rel (%p12) target = $region8
  $region5: #{gpt_forward.8} parent=0 // loop_body
    %s16 = ssub.s32 %s11, 1
    %s17 = ssub.s32 %s11, 2
    %s24 = sadd.s32 1, %s19
    %p25 = scmp.ge.s32.totalorder %s24, 4
    %s26 = scalar_select %p25, 0, %s24
    %s27 = sadd.s32 1, %s18
    %s28 = scalar_select %p25, %s27, %s18
    %p29 = scmp.ge.s32.totalorder %s28, 2
    %s30 = scalar_select %p29, 0, %s28
    %s31 = ssub.s32 %s18, %s30
    %s32 = ssub.s32 %s19, %s26
    %s33 = sor.u32 %s31, %s32
    %p34 = scmp.eq.s32.totalorder %s33, 0
    %s36 = sadd.s32 %s35, 1
    %s37 = scalar_select %p34, %s35, %s36
    %p40 = pneg %p34
    %p41 = scmp.eq.s32.totalorder %s11, 7
    %p42 = por %p40, %p41
    %p43 = scmp.ne.s32.totalorder %s35, %s38
    %p44 = scmp.eq.s32.totalorder %s11, 0
    %p45 = por %p43, %p44
    %p46 = scmp.ne.s32.totalorder %s35, %s38
    %p47 = scmp.eq.s32.totalorder %s16, 7
    %p48 = por %p46, %p47
    %p49 = scmp.ne.s32.totalorder %s38, %s39
    %p50 = scmp.eq.s32.totalorder %s16, 0
    %p51 = por %p49, %p50
    %p52 = scmp.ne.s32.totalorder %s38, %s39
    %p53 = scmp.eq.s32.totalorder %s17, 7
    %p54 = por %p52, %p53
    %p56 = scmp.ne.s32.totalorder %s39, %s55
    %p57 = scmp.eq.s32.totalorder %s17, 0
    %p58 = por %p56, %p57
    %s59 = ssub.s32 %s18, %s30
    %s60 = ssub.s32 %s19, %s26
    %s61 = sor.u32 %s59, %s60
    %p62 = scmp.eq.s32.totalorder %s61, 0
    %s64 = sadd.s32 %s63, 1
    %s65 = scalar_select %p62, %s63, %s64
    %p68 = pneg %p62
    %p69 = scmp.eq.s32.totalorder %s11, 7
    %p70 = por %p68, %p69
    %p71 = scmp.ne.s32.totalorder %s63, %s66
    %p72 = scmp.eq.s32.totalorder %s11, 0
    %p73 = por %p71, %p72
    %p74 = scmp.ne.s32.totalorder %s63, %s66
    %p75 = scmp.eq.s32.totalorder %s16, 7
    %p76 = por %p74, %p75
    %p77 = scmp.ne.s32.totalorder %s66, %s67
    %p78 = scmp.eq.s32.totalorder %s16, 0
    %p79 = por %p77, %p78
    %p80 = scmp.ne.s32.totalorder %s66, %s67
    %p81 = scmp.eq.s32.totalorder %s17, 7
    %p82 = por %p80, %p81
    %p84 = scmp.ne.s32.totalorder %s67, %s83
    %p85 = scmp.eq.s32.totalorder %s17, 0
    %p86 = por %p84, %p85
    %s87 = ssub.s32 %s18, %s30
    %s88 = ssub.s32 %s19, %s26
    %s89 = sor.u32 %s87, %s88
    %p90 = scmp.eq.s32.totalorder %s89, 0
    %s92 = sadd.s32 %s91, 1
    %s93 = scalar_select %p90, %s91, %s92
    %p96 = pneg %p90
    %p97 = scmp.eq.s32.totalorder %s11, 7
    %p98 = por %p96, %p97
    %p99 = scmp.ne.s32.totalorder %s91, %s94
    %p100 = scmp.eq.s32.totalorder %s11, 0
    %p101 = por %p99, %p100
    %p102 = scmp.ne.s32.totalorder %s91, %s94
    %p103 = scmp.eq.s32.totalorder %s16, 7
    %p104 = por %p102, %p103
    %p105 = scmp.ne.s32.totalorder %s94, %s95
    %p106 = scmp.eq.s32.totalorder %s16, 0
    %p107 = por %p105, %p106
    %p108 = scmp.ne.s32.totalorder %s94, %s95
    %p109 = scmp.eq.s32.totalorder %s17, 7
    %p110 = por %p108, %p109
    %p112 = scmp.ne.s32.totalorder %s95, %s111
    %p113 = scmp.eq.s32.totalorder %s17, 0
    %p114 = por %p112, %p113
    %s116 = sadd.s32 %s115, 1
    %p119 = scmp.eq.s32.totalorder %s11, 7
    %p120 = scmp.ne.s32.totalorder %s115, %s117
    %p121 = scmp.eq.s32.totalorder %s11, 0
    %p122 = por %p120, %p121
    %p123 = scmp.ne.s32.totalorder %s115, %s117
    %p124 = scmp.eq.s32.totalorder %s16, 7
    %p125 = por %p123, %p124
    %p126 = scmp.ne.s32.totalorder %s117, %s118
    %p127 = scmp.eq.s32.totalorder %s16, 0
    %p128 = por %p126, %p127
    %p129 = scmp.ne.s32.totalorder %s117, %s118
    %p130 = scmp.eq.s32.totalorder %s17, 7
    %p131 = por %p129, %p130
    %p133 = scmp.ne.s32.totalorder %s118, %s132
    %p134 = scmp.eq.s32.totalorder %s17, 0
    %p135 = por %p133, %p134
    %s137 = sadd.s32 %s136, 1
    %p140 = scmp.eq.s32.totalorder %s11, 7
    %p141 = scmp.ne.s32.totalorder %s136, %s138
    %p142 = scmp.eq.s32.totalorder %s11, 0
    %p143 = por %p141, %p142
    %p144 = scmp.ne.s32.totalorder %s136, %s138
    %p145 = scmp.eq.s32.totalorder %s16, 7
    %p146 = por %p144, %p145
    %p147 = scmp.ne.s32.totalorder %s138, %s139
    %p148 = scmp.eq.s32.totalorder %s16, 0
    %p149 = por %p147, %p148
    %p150 = scmp.ne.s32.totalorder %s138, %s139
    %p151 = scmp.eq.s32.totalorder %s17, 7
    %p152 = por %p150, %p151
    %p154 = scmp.ne.s32.totalorder %s139, %s153
    %p155 = scmp.eq.s32.totalorder %s17, 0
    %p156 = por %p154, %p155
    %s157 = ssub.s32 %s18, %s30
    %s158 = ssub.s32 %s19, %s26
    %s159 = sor.u32 %s157, %s158
    %p160 = scmp.eq.s32.totalorder %s159, 0
    %s162 = sadd.s32 %s161, 1
    %s163 = scalar_select %p160, %s161, %s162
    %p166 = pneg %p160
    %p167 = scmp.eq.s32.totalorder %s11, 7
    %p168 = por %p166, %p167
    %p169 = scmp.ne.s32.totalorder %s161, %s164
    %p170 = scmp.eq.s32.totalorder %s11, 0
    %p171 = por %p169, %p170
    %p172 = scmp.ne.s32.totalorder %s161, %s164
    %p173 = scmp.eq.s32.totalorder %s16, 7
    %p174 = por %p172, %p173
    %p175 = scmp.ne.s32.totalorder %s164, %s165
    %p176 = scmp.eq.s32.totalorder %s16, 0
    %p177 = por %p175, %p176
    %p178 = scmp.ne.s32.totalorder %s164, %s165
    %p179 = scmp.eq.s32.totalorder %s17, 7
    %p180 = por %p178, %p179
    %p182 = scmp.ne.s32.totalorder %s165, %s181
    %p183 = scmp.eq.s32.totalorder %s17, 0
    %p184 = por %p182, %p183
    %p185 = scmp.le.s32.totalorder 1, %s11
    %p186 = scmp.lt.s32.totalorder %s11, 9
    %p187 = pnand %p185, %p186
    %p188 = pneg %p187
    // Predicated region
    $region9: #{gpt_forward.8} parent=5 // pred_check
      _
    $region10: #{gpt_forward.8} parent=5 // pred_check_branch
      %190 = sbr.rel (%p187) target = $region12
    $region11: #{gpt_forward.8} parent=5 // pred_region
      %s191 = ssub.s32 %s11, 1
      // Predicated region
      $region13: #{gpt_forward.8} parent=11 // pred_check
        %p192 = pneg %p128
      $region14: #{gpt_forward.8} parent=11 // pred_check_branch
        %194 = sbr.rel (%p192) target = $region16
      $region15: #{gpt_forward.8} parent=11 // pred_region
        _
      $region16: #{gpt_forward.8} parent=11 // pred_fallthru
        _
      // Predicated region
      $region17: #{gpt_forward.8} parent=11 // pred_check
        %p195 = pneg %p149
      $region18: #{gpt_forward.8} parent=11 // pred_check_branch
        %197 = sbr.rel (%p195) target = $region20
      $region19: #{gpt_forward.8} parent=11 // pred_region
        _
      $region20: #{gpt_forward.8} parent=11 // pred_fallthru
        _
    $region12: #{gpt_forward.8} parent=5 // pred_fallthru
      _
    %p198 = scmp.lt.s32.totalorder %s11, 8
    // Predicated region
    $region21: #{gpt_forward.8} parent=5 // pred_check
      %p199 = pneg %p198
    $region22: #{gpt_forward.8} parent=5 // pred_check_branch
      %201 = sbr.rel (%p199) target = $region24
    $region23: #{gpt_forward.8} parent=5 // pred_region
      // Predicated region
      $region25: #{gpt_forward.8} parent=23 // pred_check
        %p202 = pneg %p45
      $region26: #{gpt_forward.8} parent=23 // pred_check_branch
        %204 = sbr.rel (%p202) target = $region28
      $region27: #{gpt_forward.8} parent=23 // pred_region
        %p205 = scmp.lt.s32.totalorder %s18, 1
        %s206 = scalar_select %p205, %s18, 1
        %p207 = scmp.lt.s32.totalorder %s19, 3
        %s208 = scalar_select %p207, %s19, 3
        %s209 = smul.addr %s206, 4
        %s210 = sadd.s32 %s208, %s209
        %s211 = smul.addr %s210, 8
        %s212 = scalar_lea.vmem %s0, %s211
      $region28: #{gpt_forward.8} parent=23 // pred_fallthru
        _
      // Predicated region
      $region29: #{gpt_forward.8} parent=23 // pred_check
        %p213 = pneg %p73
      $region30: #{gpt_forward.8} parent=23 // pred_check_branch
        %215 = sbr.rel (%p213) target = $region32
      $region31: #{gpt_forward.8} parent=23 // pred_region
        %p216 = scmp.lt.s32.totalorder %s18, 1
        %s217 = scalar_select %p216, %s18, 1
        %p218 = scmp.lt.s32.totalorder %s19, 3
        %s219 = scalar_select %p218, %s19, 3
        %s220 = smul.addr %s217, 4
        %s221 = sadd.s32 %s219, %s220
        %s222 = smul.addr %s221, 8
        %s223 = scalar_lea.vmem %s1, %s222
      $region32: #{gpt_forward.8} parent=23 // pred_fallthru
        _
      // Predicated region
      $region33: #{gpt_forward.8} parent=23 // pred_check
        %p224 = pneg %p101
      $region34: #{gpt_forward.8} parent=23 // pred_check_branch
        %226 = sbr.rel (%p224) target = $region36
      $region35: #{gpt_forward.8} parent=23 // pred_region
        %p227 = scmp.lt.s32.totalorder %s18, 1
        %s228 = scalar_select %p227, %s18, 1
        %p229 = scmp.lt.s32.totalorder %s19, 3
        %s230 = scalar_select %p229, %s19, 3
        %s231 = smul.addr %s228, 4
        %s232 = sadd.s32 %s230, %s231
        %s233 = smul.addr %s232, 8
        %s234 = scalar_lea.vmem %s2, %s233
      $region36: #{gpt_forward.8} parent=23 // pred_fallthru
        _
    $region24: #{gpt_forward.8} parent=5 // pred_fallthru
      _
    %p235 = scmp.le.s32.totalorder 1, %s11
    %p236 = scmp.lt.s32.totalorder %s11, 9
    %p237 = pnand %p235, %p236
    %p238 = pneg %p237
    // Predicated region
    $region37: #{gpt_forward.8} parent=5 // pred_check
      _
    $region38: #{gpt_forward.8} parent=5 // pred_check_branch
      %240 = sbr.rel (%p237) target = $region40
    $region39: #{gpt_forward.8} parent=5 // pred_region
      %s241 = ssub.s32 %s11, 1
      %p242 = scmp.lt.s32.totalorder %s20, 1
      %s243 = scalar_select %p242, %s20, 1
      %p244 = scmp.lt.s32.totalorder %s21, 3
      %s245 = scalar_select %p244, %s21, 3
      %s246 = smul.addr %s243, 4
      %s247 = sadd.s32 %s245, %s246
      %s248 = smul.addr %s247, 8
      %s249 = scalar_lea.vmem %s0, %s248
      %p250 = pneg %p51
      %p251 = pneg %p48
      %p252 = scmp.lt.s32.totalorder %s20, 1
      %s253 = scalar_select %p252, %s20, 1
      %p254 = scmp.lt.s32.totalorder %s21, 3
      %s255 = scalar_select %p254, %s21, 3
      %s256 = smul.addr %s253, 4
      %s257 = sadd.s32 %s255, %s256
      %s258 = smul.addr %s257, 8
      %s259 = scalar_lea.vmem %s1, %s258
      %p260 = pneg %p79
      %p261 = pneg %p76
      %p262 = scmp.lt.s32.totalorder %s20, 1
      %s263 = scalar_select %p262, %s20, 1
      %p264 = scmp.lt.s32.totalorder %s21, 3
      %s265 = scalar_select %p264, %s21, 3
      %s266 = smul.addr %s263, 4
      %s267 = sadd.s32 %s265, %s266
      %s268 = smul.addr %s267, 8
      %s269 = scalar_lea.vmem %s2, %s268
      %p270 = pneg %p107
      %p271 = pneg %p104
      %p272 = pneg %p128
      %p273 = pneg %p125
      %p274 = pneg %p149
      %p275 = pneg %p146
      %p276 = pneg %p177
      %p277 = pneg %p174
      %p278 = scmp.lt.s32.totalorder %s20, 1
      %s279 = scalar_select %p278, %s20, 1
      %p280 = scmp.lt.s32.totalorder %s21, 3
      %s281 = scalar_select %p280, %s21, 3
      %s282 = smul.addr %s279, 4
      %s283 = sadd.s32 %s281, %s282
      %s284 = smul.addr %s283, 8
      %s285 = scalar_lea.vmem %s5, %s284
      %p286 = scmp.lt.s32.totalorder %s20, 1
      %s287 = scalar_select %p286, %s20, 1
      %p288 = scmp.lt.s32.totalorder %s21, 3
      %s289 = scalar_select %p288, %s21, 3
      %s290 = smul.addr %s287, 4
      %s291 = sadd.s32 %s289, %s290
      %s292 = smul.addr %s291, 8
      %s293 = scalar_lea.vmem %s0, %s292
      %p294 = scmp.lt.s32.totalorder %s20, 1
      %s295 = scalar_select %p294, %s20, 1
      %p296 = scmp.lt.s32.totalorder %s21, 3
      %s297 = scalar_select %p296, %s21, 3
      %s298 = smul.addr %s295, 4
      %s299 = sadd.s32 %s297, %s298
      %s300 = smul.addr %s299, 8
      %s301 = scalar_lea.vmem %s1, %s300
      %p302 = scmp.lt.s32.totalorder %s20, 1
      %s303 = scalar_select %p302, %s20, 1
      %p304 = scmp.lt.s32.totalorder %s21, 3
      %s305 = scalar_select %p304, %s21, 3
      %s306 = smul.addr %s303, 4
      %s307 = sadd.s32 %s305, %s306
      %s308 = smul.addr %s307, 8
      %s309 = scalar_lea.vmem %s2, %s308
      %p310 = scmp.lt.s32.totalorder %s20, 1
      %s311 = scalar_select %p310, %s20, 1
      %p312 = scmp.lt.s32.totalorder %s21, 3
      %s313 = scalar_select %p312, %s21, 3
      %s314 = smul.addr %s311, 4
      %s315 = sadd.s32 %s313, %s314
      %s316 = smul.addr %s315, 8
      %s317 = scalar_lea.vmem %s5, %s316
      %v319 = vld [vmem:[%s293] sm:$0xff]
      %v320 = vld [vmem:[%s301] sm:$0xff]
      %v321 = vld [vmem:[%s309] sm:$0xff]
      %v322 = vld [vmem:[%s3] sm:$0xff]
      %v323 = vld [vmem:[%s4] sm:$0xff]
      %325 = vrot.lane.b32.xlu0 %v319, 124
      %v326 = vpop.permute.xlu0 %325
      %328 = vrot.lane.b32.xlu0 %v319, 4
      %v329 = vpop.permute.xlu0 %328
      %vm331 = vcmask 31744
      %v332 = vsel %vm331, %v326, %v329
      %v333 = vmul.f32 %v319, %v322
      %v334 = vmul.f32 %v332, %v323
      %v335 = vadd.f32 %v333, %v334
      %v336 = vpack.c.bf16 %v335, %v335
      %338 = vrot.lane.b32.xlu0 %v320, 124
      %v339 = vpop.permute.xlu0 %338
      %341 = vrot.lane.b32.xlu0 %v320, 4
      %v342 = vpop.permute.xlu0 %341
      %v344 = vsel %vm331, %v339, %v342
      %v345 = vmul.f32 %v320, %v322
      %v346 = vmul.f32 %v344, %v323
      %v347 = vadd.f32 %v345, %v346
      %v348 = vpack.c.bf16 %v347, %v347
      %vm349 = vcmask 64512
      %v351 = vsel %vm349, %v336, 0
      %v354 = vsel %vm349, %v348, 0
      %356 = vmatpush.bf16.xpose.msra.mxu0 0
      %357 = vmatpush.bf16.xpose.msra.mxu0 0
      %358 = vmatpush.bf16.xpose.msra.mxu0 0
      %359 = vmatpush.bf16.xpose.msra.mxu0 0
      %360 = vmatpush.bf16.xpose.msra.mxu0 0
      %361 = vmatpush.bf16.xpose.msra.mxu0 0
      %362 = vmatpush.bf16.xpose.msra.mxu0 0
      %363 = vmatpush.bf16.xpose.msra.mxu0 %v354
      %364 = vmatmul.bf16.gmra.mxu0 %v351
      %v365 = vpop.f32.mrf.mxu0
      %v366 = vadd.f32 0.0, %v365
      %v367 = vpop.f32.mrf.mxu0
      %368 = vdwg.mxu0
      %v369 = vmul.f32 %v366, 0.35355338
      %v370 = vlaneseq
      %v371 = vshrl.u32 %v370, 7
      %v372 = vlaneseq
      %v373 = vand.u32 %v372, 127
      %vm374 = vcmp.ge.s32.totalorder %v371, %v373
      %v375 = vsel %vm374, %v369, -1e+30
      %v376 = vsel %vm349, %v375, -inf
      %377 = vmax.xlane.f32.xlu0 %v376
      %v378 = vpop.xlane.xlu0 %377
      %v379 = vsub.f32 %v375, %v378
      %v380 = vmul.f32 %v379, 1.442695
      %v381 = vpow.pop %v380
      %v382 = vsel %vm349, %v381, 0.0
      %383 = vadd.xlane.f32.xlu0 %v382
      %v384 = vpop.xlane.xlu0 %383
      %v385 = vrcp.pop %v384
      %v386 = vmul.f32 %v384, %v385
      %v387 = vsub.f32 1.0, %v386
      %v388 = vmul.f32 %v385, %v387
      %v389 = vadd.f32 %v385, %v388
      %vm390 = vweird.f32 %v384
      %vm391 = vweird.f32 %v385
      %vm392 = vmor %vm390, %vm391
      %v393 = vsel %vm392, %v385, %v389
      %v394 = vand.u32 2147483647, %v384
      %vm395 = vcmp.eq.f32.partialorder %v394, 8.507059e+37
      %v396 = vand.u32 %v384, 2147483648
      %v397 = vor.u32 1.1754944e-38, %v396
      %v398 = vsel %vm395, %v397, %v393
      %v399 = vmul.f32 %v381, %v398
      %v400 = vpack.c.bf16 %v399, %v399
      %v401 = vpack.c.bf16 %v321, %v321
      %v403 = vsel %vm349, %v400, 0
      %vm405 = vcmask 1043456
      %v407 = vsel %vm405, %v401, 0
      %409 = vmatpush.bf16.msra.mxu0 0
      %410 = vmatpush.bf16.msra.mxu0 0
      %411 = vmatpush.bf16.msra.mxu0 0
      %412 = vmatpush.bf16.msra.mxu0 0
      %413 = vmatpush.bf16.msra.mxu0 0
      %414 = vmatpush.bf16.msra.mxu0 0
      %415 = vmatpush.bf16.msra.mxu0 0
      %416 = vmatpush.bf16.msra.mxu0 %v407
      %417 = vmatmul.bf16.gmra.mxu0 %v403
      %v418 = vpop.f32.mrf.mxu0
      %v419 = vadd.f32 0.0, %v418
      %v420 = vpop.f32.mrf.mxu0
      %421 = vdwg.mxu0
      %422 = vst.msk [vmem:[%s317] sm:$0xff] %vm349, %v419
      %p423 = scmp.lt.s32.totalorder %s20, 1
      %s424 = scalar_select %p423, %s20, 1
      %p425 = scmp.lt.s32.totalorder %s21, 3
      %s426 = scalar_select %p425, %s21, 3
      %s427 = smul.addr %s424, 4
      %s428 = sadd.s32 %s426, %s427
      %s429 = smul.addr %s428, 8
      %s430 = scalar_lea.vmem %s5, %s429
      // Predicated region
      $region41: #{gpt_forward.8} parent=39 // pred_check
        %p431 = pneg %p174
      $region42: #{gpt_forward.8} parent=39 // pred_check_branch
        %433 = sbr.rel (%p431) target = $region44
      $region43: #{gpt_forward.8} parent=39 // pred_region
        _
      $region44: #{gpt_forward.8} parent=39 // pred_fallthru
        _
    $region40: #{gpt_forward.8} parent=5 // pred_fallthru
      _
    %p434 = scmp.le.s32.totalorder 2, %s11
    // Predicated region
    $region45: #{gpt_forward.8} parent=5 // pred_check
      %p435 = pneg %p434
    $region46: #{gpt_forward.8} parent=5 // pred_check_branch
      %437 = sbr.rel (%p435) target = $region48
    $region47: #{gpt_forward.8} parent=5 // pred_region
      %s438 = ssub.s32 %s11, 2
      // Predicated region
      $region49: #{gpt_forward.8} parent=47 // pred_check
        %p439 = pneg %p180
      $region50: #{gpt_forward.8} parent=47 // pred_check_branch
        %441 = sbr.rel (%p439) target = $region52
      $region51: #{gpt_forward.8} parent=47 // pred_region
        %p442 = scmp.lt.s32.totalorder %s22, 1
        %s443 = scalar_select %p442, %s22, 1
        %p444 = scmp.lt.s32.totalorder %s23, 3
        %s445 = scalar_select %p444, %s23, 3
        %s446 = smul.addr %s443, 4
        %s447 = sadd.s32 %s445, %s446
        %s448 = smul.addr %s447, 8
        %s449 = scalar_lea.vmem %s5, %s448
      $region52: #{gpt_forward.8} parent=47 // pred_fallthru
        _
    $region48: #{gpt_forward.8} parent=5 // pred_fallthru
      _
  $region6: #{gpt_forward.8} parent=0 // loop_footer
    %s15 = sadd.s32 1, %s11
  $region7: #{gpt_forward.8} parent=0 // loop_footer_branch
    %10 = sbr.rel target = $region3
  $region8: #{gpt_forward.8} parent=0 // loop_exit
    _

// kernel: gpt_forward.13
$region0: #{gpt_forward.13}
  #allocation0 [shape = 'u32[]', space=smem, size = 0x4, offset = 0x4, fixed_abs, tag = 'smem constant byte address 0x4 - core index']
  #allocation1 [shape = 'u32[72,128]{1,0:T(1,128)}', space=vmem, size = 0x9000, scoped, tag = 'internal scratch']
  %s0 = inlined_call_operand.vmem [shape: f32[2,32], index: 0, kind: input, shape index: {}]
  %s1 = inlined_call_operand.vmem [shape: bf16[32,64], index: 1, kind: input, shape index: {}]
  %s2 = inlined_call_operand.hbm [shape: f32[2,64], index: 2, kind: output, shape index: {}]
  %s3 = sld [smem:[#allocation0]]
  $region18: #{gpt_forward.13} parent=0
    _
  %s5 = ssub.s32 1, %s3
  %s6 = scalar_select 0, %s5, %s3
  $region1: #{gpt_forward.13} parent=0
    #allocation2 [shape = 'u8[1024]{0}', space=vmem, size = 0x400, scoped, tag = 'output window, operand 0, single buffered']
    #allocation3 [shape = 's32[1]{0}', space=sflag, size = 0x4, scoped, tag = 'scoped memory for gpt_forward.13']
    %7 = vsyncpa [#allocation3], 0
    // Predicated region
    $region2: #{gpt_forward.13} parent=1 // pred_check
      _
    $region3: #{gpt_forward.13} parent=1 // pred_check_branch
      %9 = sbr.rel (0) target = $region5
    $region4: #{gpt_forward.13} parent=1 // pred_region
      _
    $region5: #{gpt_forward.13} parent=1 // pred_fallthru
      _
    // Predicated region
    $region6: #{gpt_forward.13} parent=1 // pred_check
      _
    $region7: #{gpt_forward.13} parent=1 // pred_check_branch
      %11 = sbr.rel (0) target = $region9
    $region8: #{gpt_forward.13} parent=1 // pred_region
      _
    $region9: #{gpt_forward.13} parent=1 // pred_fallthru
      _
    %v13 = vld [vmem:[%s0] sm:$0x3]
    %v14 = vmul.f32 %v13, %v13
    %vm15 = vcmask 254976
    %v16 = vsel %vm15, %v14, 0.0
    %17 = vadd.xlane.f32.xlu0 %v16
    %v18 = vpop.xlane.xlu0 %17
    %v19 = vrcp.pop 32.0
    %v20 = vmul.f32 32.0, %v19
    %v21 = vsub.f32 1.0, %v20
    %v22 = vmul.f32 %v19, %v21
    %v23 = vadd.f32 %v19, %v22
    %vm24 = vweird.f32 %v19
    %v25 = vsel %vm24, %v19, %v23
    %v26 = vmul.f32 %v18, %v25
    %v27 = vadd.f32 %v26, 1e-06
    %v28 = vrsqrt.pop %v27
    %v29 = vmul.f32 %v28, %v27
    %v30 = vmul.f32 %v29, %v28
    %v31 = vmul.f32 0.5, %v30
    %v32 = vsub.f32 1.5, %v31
    %v33 = vmul.f32 %v28, %v32
    %vm34 = vweird.f32 %v27
    %vm35 = vweird.f32 %v28
    %vm36 = vmor %vm34, %vm35
    %v37 = vsel %vm36, %v28, %v33
    %v38 = vmul.f32 %v13, %v37
    %v39 = vpack.c.bf16 %v38, %v38
    %v40 = vld [vmem:[%s1] sm:$0xf]
    %v41 = vld [vmem:[%s1 + $0x4] sm:$0xf]
    %v42 = vld [vmem:[%s1 + $0x8] sm:$0xf]
    %v43 = vld [vmem:[%s1 + $0xc] sm:$0xf]
    %v48 = vunpack.c.l.b16 %v40
    %v49 = vunpack.c.l.b16 %v41
    %v50 = vunpack.c.l.b16 %v42
    %v51 = vunpack.c.l.b16 %v43
    %v52 = vpack.c.b16 %v49, %v48
    %v53 = vpack.c.b16 %v51, %v50
    %vm56 = vcmask 261120
    %v58 = vsel %vm56, %v39, 0
    %60 = vmatpush.bf16.msra.mxu0 0
    %61 = vmatpush.bf16.msra.mxu0 0
    %62 = vmatpush.bf16.msra.mxu0 0
    %63 = vmatpush.bf16.msra.mxu0 0
    %64 = vmatpush.bf16.msra.mxu0 0
    %65 = vmatpush.bf16.msra.mxu0 0
    %66 = vmatpush.bf16.msra.mxu0 %v53
    %67 = vmatpush.bf16.msra.mxu0 %v52
    %68 = vmatmul.bf16.gmra.mxu0 %v58
    %v69 = vpop.f32.mrf.mxu0
    %v70 = vadd.f32 0.0, %v69
    %v71 = vpop.f32.mrf.mxu0
    %72 = vdwg.mxu0
    %vm73 = vcmask 517120
    %74 = vst.msk [vmem:[#allocation2] sm:$0x3] %vm73, %v70
    // Predicated region
    $region10: #{gpt_forward.13} parent=1 // pred_check
      _
    $region11: #{gpt_forward.13} parent=1 // pred_check_branch
      %76 = sbr.rel (0) target = $region13
    $region12: #{gpt_forward.13} parent=1 // pred_region
      %78 = vsyncadd [#allocation3], 0
      %s80 = sshll.u32 [#allocation2], 4
      %s81 = int_to_ptr.vmem [resolvable:$true] %s80
      %s82 = sshll.u32 %s2, 4
      %s83 = int_to_ptr.hbm [resolvable:$true] %s82
      %85 = dma.vmem_to_hbm [thread:$0]  %s81, 32, %s83, [#allocation3]
    $region13: #{gpt_forward.13} parent=1 // pred_fallthru
      _
    // Predicated region
    $region14: #{gpt_forward.13} parent=1 // pred_check
      _
    $region15: #{gpt_forward.13} parent=1 // pred_check_branch
      %87 = sbr.rel (0) target = $region17
    $region16: #{gpt_forward.13} parent=1 // pred_region
      %89 = dma.done [#allocation3], 32
    $region17: #{gpt_forward.13} parent=1 // pred_fallthru
      _
    %90 = vsyncpa [#allocation3], 1

// kernel: gpt_forward.9
$region0: #{gpt_forward.9}
  #allocation0 [shape = 'u32[]', space=smem, size = 0x4, offset = 0x4, fixed_abs, tag = 'smem constant byte address 0x4 - core index']
  #allocation1 [shape = 'u32[72,128]{1,0:T(1,128)}', space=vmem, size = 0x9000, scoped, tag = 'internal scratch']
  %s0 = inlined_call_operand.vmem [shape: f32[2,8,32], index: 0, kind: input, shape index: {}]
  %s1 = inlined_call_operand.vmem [shape: f32[2,8,32], index: 1, kind: input, shape index: {}]
  %s2 = inlined_call_operand.vmem [shape: bf16[32,32], index: 2, kind: input, shape index: {}]
  %s3 = inlined_call_operand.vmem [shape: bf16[32,64], index: 3, kind: input, shape index: {}]
  %s4 = inlined_call_operand.vmem [shape: bf16[32,64], index: 4, kind: input, shape index: {}]
  %s5 = inlined_call_operand.vmem [shape: bf16[64,32], index: 5, kind: input, shape index: {}]
  %s6 = inlined_call_operand.vmem [shape: f32[2,8,32], index: 6, kind: output, shape index: {}]
  %s7 = sld [smem:[#allocation0]]
  $region57: #{gpt_forward.9} parent=0
    _
  %s9 = ssub.s32 1, %s7
  %s10 = scalar_select 0, %s9, %s7
  loop: start=0, step=1, limit=4
  $region2: #{gpt_forward.9} parent=0 // loop_pre_header
    _
  $region3: #{gpt_forward.9} parent=0 // loop_header
    %s12 = sphi 0, %s16
    %p13 = scmp.ge.s32.totalorder %s12, 4
    %s19 = sphi 0, %s31
    %s20 = sphi 0, %s27
    %s21 = sphi 0, %s19
    %s22 = sphi 0, %s20
    %s23 = sphi 0, %s21
    %s24 = sphi 0, %s22
    %s36 = sphi 0, %s38
    %s39 = sphi 0, %s36
    %s40 = sphi 0, %s39
    %s56 = sphi 0, %s40
    %s64 = sphi 0, %s66
    %s67 = sphi 0, %s64
    %s68 = sphi 0, %s67
    %s84 = sphi 0, %s68
    %s88 = sphi 0, %s88
    %s90 = sphi 0, %s88
    %s91 = sphi 0, %s90
    %s105 = sphi 0, %s91
    %s109 = sphi 0, %s109
    %s111 = sphi 0, %s109
    %s112 = sphi 0, %s111
    %s126 = sphi 0, %s112
    %s130 = sphi 0, %s130
    %s132 = sphi 0, %s130
    %s133 = sphi 0, %s132
    %s147 = sphi 0, %s133
    %s151 = sphi 0, %s151
    %s153 = sphi 0, %s151
    %s154 = sphi 0, %s153
    %s168 = sphi 0, %s154
    %s176 = sphi 0, %s178
    %s179 = sphi 0, %s176
    %s180 = sphi 0, %s179
    %s196 = sphi 0, %s180
  $region4: #{gpt_forward.9} parent=0 // loop_header_branch
    %15 = sbr.rel (%p13) target = $region8
  $region5: #{gpt_forward.9} parent=0 // loop_body
    %s17 = ssub.s32 %s12, 1
    %s18 = ssub.s32 %s12, 2
    %s25 = sadd.s32 1, %s20
    %p26 = scmp.ge.s32.totalorder %s25, 1
    %s27 = scalar_select %p26, 0, %s25
    %s28 = sadd.s32 1, %s19
    %s29 = scalar_select %p26, %s28, %s19
    %p30 = scmp.ge.s32.totalorder %s29, 2
    %s31 = scalar_select %p30, 0, %s29
    %s32 = ssub.s32 %s19, %s31
    %s33 = ssub.s32 %s20, %s27
    %s34 = sor.u32 %s32, %s33
    %p35 = scmp.eq.s32.totalorder %s34, 0
    %s37 = sadd.s32 %s36, 1
    %s38 = scalar_select %p35, %s36, %s37
    %p41 = pneg %p35
    %p42 = scmp.eq.s32.totalorder %s12, 1
    %p43 = por %p41, %p42
    %p44 = scmp.ne.s32.totalorder %s36, %s39
    %p45 = scmp.eq.s32.totalorder %s12, 0
    %p46 = por %p44, %p45
    %p47 = scmp.ne.s32.totalorder %s36, %s39
    %p48 = scmp.eq.s32.totalorder %s17, 1
    %p49 = por %p47, %p48
    %p50 = scmp.ne.s32.totalorder %s39, %s40
    %p51 = scmp.eq.s32.totalorder %s17, 0
    %p52 = por %p50, %p51
    %p53 = scmp.ne.s32.totalorder %s39, %s40
    %p54 = scmp.eq.s32.totalorder %s18, 1
    %p55 = por %p53, %p54
    %p57 = scmp.ne.s32.totalorder %s40, %s56
    %p58 = scmp.eq.s32.totalorder %s18, 0
    %p59 = por %p57, %p58
    %s60 = ssub.s32 %s19, %s31
    %s61 = ssub.s32 %s20, %s27
    %s62 = sor.u32 %s60, %s61
    %p63 = scmp.eq.s32.totalorder %s62, 0
    %s65 = sadd.s32 %s64, 1
    %s66 = scalar_select %p63, %s64, %s65
    %p69 = pneg %p63
    %p70 = scmp.eq.s32.totalorder %s12, 1
    %p71 = por %p69, %p70
    %p72 = scmp.ne.s32.totalorder %s64, %s67
    %p73 = scmp.eq.s32.totalorder %s12, 0
    %p74 = por %p72, %p73
    %p75 = scmp.ne.s32.totalorder %s64, %s67
    %p76 = scmp.eq.s32.totalorder %s17, 1
    %p77 = por %p75, %p76
    %p78 = scmp.ne.s32.totalorder %s67, %s68
    %p79 = scmp.eq.s32.totalorder %s17, 0
    %p80 = por %p78, %p79
    %p81 = scmp.ne.s32.totalorder %s67, %s68
    %p82 = scmp.eq.s32.totalorder %s18, 1
    %p83 = por %p81, %p82
    %p85 = scmp.ne.s32.totalorder %s68, %s84
    %p86 = scmp.eq.s32.totalorder %s18, 0
    %p87 = por %p85, %p86
    %s89 = sadd.s32 %s88, 1
    %p92 = scmp.eq.s32.totalorder %s12, 1
    %p93 = scmp.ne.s32.totalorder %s88, %s90
    %p94 = scmp.eq.s32.totalorder %s12, 0
    %p95 = por %p93, %p94
    %p96 = scmp.ne.s32.totalorder %s88, %s90
    %p97 = scmp.eq.s32.totalorder %s17, 1
    %p98 = por %p96, %p97
    %p99 = scmp.ne.s32.totalorder %s90, %s91
    %p100 = scmp.eq.s32.totalorder %s17, 0
    %p101 = por %p99, %p100
    %p102 = scmp.ne.s32.totalorder %s90, %s91
    %p103 = scmp.eq.s32.totalorder %s18, 1
    %p104 = por %p102, %p103
    %p106 = scmp.ne.s32.totalorder %s91, %s105
    %p107 = scmp.eq.s32.totalorder %s18, 0
    %p108 = por %p106, %p107
    %s110 = sadd.s32 %s109, 1
    %p113 = scmp.eq.s32.totalorder %s12, 1
    %p114 = scmp.ne.s32.totalorder %s109, %s111
    %p115 = scmp.eq.s32.totalorder %s12, 0
    %p116 = por %p114, %p115
    %p117 = scmp.ne.s32.totalorder %s109, %s111
    %p118 = scmp.eq.s32.totalorder %s17, 1
    %p119 = por %p117, %p118
    %p120 = scmp.ne.s32.totalorder %s111, %s112
    %p121 = scmp.eq.s32.totalorder %s17, 0
    %p122 = por %p120, %p121
    %p123 = scmp.ne.s32.totalorder %s111, %s112
    %p124 = scmp.eq.s32.totalorder %s18, 1
    %p125 = por %p123, %p124
    %p127 = scmp.ne.s32.totalorder %s112, %s126
    %p128 = scmp.eq.s32.totalorder %s18, 0
    %p129 = por %p127, %p128
    %s131 = sadd.s32 %s130, 1
    %p134 = scmp.eq.s32.totalorder %s12, 1
    %p135 = scmp.ne.s32.totalorder %s130, %s132
    %p136 = scmp.eq.s32.totalorder %s12, 0
    %p137 = por %p135, %p136
    %p138 = scmp.ne.s32.totalorder %s130, %s132
    %p139 = scmp.eq.s32.totalorder %s17, 1
    %p140 = por %p138, %p139
    %p141 = scmp.ne.s32.totalorder %s132, %s133
    %p142 = scmp.eq.s32.totalorder %s17, 0
    %p143 = por %p141, %p142
    %p144 = scmp.ne.s32.totalorder %s132, %s133
    %p145 = scmp.eq.s32.totalorder %s18, 1
    %p146 = por %p144, %p145
    %p148 = scmp.ne.s32.totalorder %s133, %s147
    %p149 = scmp.eq.s32.totalorder %s18, 0
    %p150 = por %p148, %p149
    %s152 = sadd.s32 %s151, 1
    %p155 = scmp.eq.s32.totalorder %s12, 1
    %p156 = scmp.ne.s32.totalorder %s151, %s153
    %p157 = scmp.eq.s32.totalorder %s12, 0
    %p158 = por %p156, %p157
    %p159 = scmp.ne.s32.totalorder %s151, %s153
    %p160 = scmp.eq.s32.totalorder %s17, 1
    %p161 = por %p159, %p160
    %p162 = scmp.ne.s32.totalorder %s153, %s154
    %p163 = scmp.eq.s32.totalorder %s17, 0
    %p164 = por %p162, %p163
    %p165 = scmp.ne.s32.totalorder %s153, %s154
    %p166 = scmp.eq.s32.totalorder %s18, 1
    %p167 = por %p165, %p166
    %p169 = scmp.ne.s32.totalorder %s154, %s168
    %p170 = scmp.eq.s32.totalorder %s18, 0
    %p171 = por %p169, %p170
    %s172 = ssub.s32 %s19, %s31
    %s173 = ssub.s32 %s20, %s27
    %s174 = sor.u32 %s172, %s173
    %p175 = scmp.eq.s32.totalorder %s174, 0
    %s177 = sadd.s32 %s176, 1
    %s178 = scalar_select %p175, %s176, %s177
    %p181 = pneg %p175
    %p182 = scmp.eq.s32.totalorder %s12, 1
    %p183 = por %p181, %p182
    %p184 = scmp.ne.s32.totalorder %s176, %s179
    %p185 = scmp.eq.s32.totalorder %s12, 0
    %p186 = por %p184, %p185
    %p187 = scmp.ne.s32.totalorder %s176, %s179
    %p188 = scmp.eq.s32.totalorder %s17, 1
    %p189 = por %p187, %p188
    %p190 = scmp.ne.s32.totalorder %s179, %s180
    %p191 = scmp.eq.s32.totalorder %s17, 0
    %p192 = por %p190, %p191
    %p193 = scmp.ne.s32.totalorder %s179, %s180
    %p194 = scmp.eq.s32.totalorder %s18, 1
    %p195 = por %p193, %p194
    %p197 = scmp.ne.s32.totalorder %s180, %s196
    %p198 = scmp.eq.s32.totalorder %s18, 0
    %p199 = por %p197, %p198
    %p200 = scmp.le.s32.totalorder 1, %s12
    %p201 = scmp.lt.s32.totalorder %s12, 3
    %p202 = pnand %p200, %p201
    %p203 = pneg %p202
    // Predicated region
    $region9: #{gpt_forward.9} parent=5 // pred_check
      _
    $region10: #{gpt_forward.9} parent=5 // pred_check_branch
      %205 = sbr.rel (%p202) target = $region12
    $region11: #{gpt_forward.9} parent=5 // pred_region
      %s206 = ssub.s32 %s12, 1
      // Predicated region
      $region13: #{gpt_forward.9} parent=11 // pred_check
        %p207 = pneg %p101
      $region14: #{gpt_forward.9} parent=11 // pred_check_branch
        %209 = sbr.rel (%p207) target = $region16
      $region15: #{gpt_forward.9} parent=11 // pred_region
        _
      $region16: #{gpt_forward.9} parent=11 // pred_fallthru
        _
      // Predicated region
      $region17: #{gpt_forward.9} parent=11 // pred_check
        %p210 = pneg %p122
      $region18: #{gpt_forward.9} parent=11 // pred_check_branch
        %212 = sbr.rel (%p210) target = $region20
      $region19: #{gpt_forward.9} parent=11 // pred_region
        _
      $region20: #{gpt_forward.9} parent=11 // pred_fallthru
        _
      // Predicated region
      $region21: #{gpt_forward.9} parent=11 // pred_check
        %p213 = pneg %p143
      $region22: #{gpt_forward.9} parent=11 // pred_check_branch
        %215 = sbr.rel (%p213) target = $region24
      $region23: #{gpt_forward.9} parent=11 // pred_region
        _
      $region24: #{gpt_forward.9} parent=11 // pred_fallthru
        _
      // Predicated region
      $region25: #{gpt_forward.9} parent=11 // pred_check
        %p216 = pneg %p164
      $region26: #{gpt_forward.9} parent=11 // pred_check_branch
        %218 = sbr.rel (%p216) target = $region28
      $region27: #{gpt_forward.9} parent=11 // pred_region
        _
      $region28: #{gpt_forward.9} parent=11 // pred_fallthru
        _
    $region12: #{gpt_forward.9} parent=5 // pred_fallthru
      _
    %p219 = scmp.lt.s32.totalorder %s12, 2
    // Predicated region
    $region29: #{gpt_forward.9} parent=5 // pred_check
      %p220 = pneg %p219
    $region30: #{gpt_forward.9} parent=5 // pred_check_branch
      %222 = sbr.rel (%p220) target = $region32
    $region31: #{gpt_forward.9} parent=5 // pred_region
      // Predicated region
      $region33: #{gpt_forward.9} parent=31 // pred_check
        %p223 = pneg %p46
      $region34: #{gpt_forward.9} parent=31 // pred_check_branch
        %225 = sbr.rel (%p223) target = $region36
      $region35: #{gpt_forward.9} parent=31 // pred_region
        %p226 = scmp.lt.s32.totalorder %s19, 1
        %s227 = scalar_select %p226, %s19, 1
        %p228 = scmp.lt.s32.totalorder %s20, 0
        %s229 = scalar_select %p228, %s20, 0
        %s230 = sadd.s32 %s229, %s227
        %s231 = smul.addr %s230, 8
        %s232 = scalar_lea.vmem %s0, %s231
      $region36: #{gpt_forward.9} parent=31 // pred_fallthru
        _
      // Predicated region
      $region37: #{gpt_forward.9} parent=31 // pred_check
        %p233 = pneg %p74
      $region38: #{gpt_forward.9} parent=31 // pred_check_branch
        %235 = sbr.rel (%p233) target = $region40
      $region39: #{gpt_forward.9} parent=31 // pred_region
        %p236 = scmp.lt.s32.totalorder %s19, 1
        %s237 = scalar_select %p236, %s19, 1
        %p238 = scmp.lt.s32.totalorder %s20, 0
        %s239 = scalar_select %p238, %s20, 0
        %s240 = sadd.s32 %s239, %s237
        %s241 = smul.addr %s240, 8
        %s242 = scalar_lea.vmem %s1, %s241
      $region40: #{gpt_forward.9} parent=31 // pred_fallthru
        _
    $region32: #{gpt_forward.9} parent=5 // pred_fallthru
      _
    %p243 = scmp.le.s32.totalorder 1, %s12
    %p244 = scmp.lt.s32.totalorder %s12, 3
    %p245 = pnand %p243, %p244
    %p246 = pneg %p245
    // Predicated region
    $region41: #{gpt_forward.9} parent=5 // pred_check
      _
    $region42: #{gpt_forward.9} parent=5 // pred_check_branch
      %248 = sbr.rel (%p245) target = $region44
    $region43: #{gpt_forward.9} parent=5 // pred_region
      %s249 = ssub.s32 %s12, 1
      %p250 = scmp.lt.s32.totalorder %s21, 1
      %s251 = scalar_select %p250, %s21, 1
      %p252 = scmp.lt.s32.totalorder %s22, 0
      %s253 = scalar_select %p252, %s22, 0
      %s254 = sadd.s32 %s253, %s251
      %s255 = smul.addr %s254, 8
      %s256 = scalar_lea.vmem %s0, %s255
      %p257 = pneg %p52
      %p258 = pneg %p49
      %p259 = scmp.lt.s32.totalorder %s21, 1
      %s260 = scalar_select %p259, %s21, 1
      %p261 = scmp.lt.s32.totalorder %s22, 0
      %s262 = scalar_select %p261, %s22, 0
      %s263 = sadd.s32 %s262, %s260
      %s264 = smul.addr %s263, 8
      %s265 = scalar_lea.vmem %s1, %s264
      %p266 = pneg %p80
      %p267 = pneg %p77
      %p268 = pneg %p101
      %p269 = pneg %p98
      %p270 = pneg %p122
      %p271 = pneg %p119
      %p272 = pneg %p143
      %p273 = pneg %p140
      %p274 = pneg %p164
      %p275 = pneg %p161
      %p276 = pneg %p192
      %p277 = pneg %p189
      %p278 = scmp.lt.s32.totalorder %s21, 1
      %s279 = scalar_select %p278, %s21, 1
      %p280 = scmp.lt.s32.totalorder %s22, 0
      %s281 = scalar_select %p280, %s22, 0
      %s282 = sadd.s32 %s281, %s279
      %s283 = smul.addr %s282, 8
      %s284 = scalar_lea.vmem %s6, %s283
      %p285 = scmp.lt.s32.totalorder %s21, 1
      %s286 = scalar_select %p285, %s21, 1
      %p287 = scmp.lt.s32.totalorder %s22, 0
      %s288 = scalar_select %p287, %s22, 0
      %s289 = sadd.s32 %s288, %s286
      %s290 = smul.addr %s289, 8
      %s291 = scalar_lea.vmem %s0, %s290
      %p292 = scmp.lt.s32.totalorder %s21, 1
      %s293 = scalar_select %p292, %s21, 1
      %p294 = scmp.lt.s32.totalorder %s22, 0
      %s295 = scalar_select %p294, %s22, 0
      %s296 = sadd.s32 %s295, %s293
      %s297 = smul.addr %s296, 8
      %s298 = scalar_lea.vmem %s1, %s297
      %p299 = scmp.lt.s32.totalorder %s21, 1
      %s300 = scalar_select %p299, %s21, 1
      %p301 = scmp.lt.s32.totalorder %s22, 0
      %s302 = scalar_select %p301, %s22, 0
      %s303 = sadd.s32 %s302, %s300
      %s304 = smul.addr %s303, 8
      %s305 = scalar_lea.vmem %s6, %s304
      %v307 = vld [vmem:[%s291] sm:$0xff]
      %v308 = vld [vmem:[%s298] sm:$0xff]
      %v309 = vpack.c.bf16 %v308, %v308
      %v310 = vld [vmem:[%s2] sm:$0xf]
      %v311 = vld [vmem:[%s2 + $0x4] sm:$0xf]
      %v312 = vld [vmem:[%s2 + $0x8] sm:$0xf]
      %v313 = vld [vmem:[%s2 + $0xc] sm:$0xf]
      %v318 = vunpack.c.l.b16 %v310
      %v319 = vunpack.c.l.b16 %v311
      %v320 = vunpack.c.l.b16 %v312
      %v321 = vunpack.c.l.b16 %v313
      %v322 = vpack.c.b16 %v319, %v318
      %v323 = vpack.c.b16 %v321, %v320
      %vm326 = vcmask 261120
      %v328 = vsel %vm326, %v309, 0
      %330 = vmatpush.bf16.msra.mxu0 0
      %331 = vmatpush.bf16.msra.mxu0 0
      %332 = vmatpush.bf16.msra.mxu0 0
      %333 = vmatpush.bf16.msra.mxu0 0
      %334 = vmatpush.bf16.msra.mxu0 0
      %335 = vmatpush.bf16.msra.mxu0 0
      %336 = vmatpush.bf16.msra.mxu0 %v323
      %337 = vmatpush.bf16.msra.mxu0 %v322
      %338 = vmatmul.bf16.gmra.mxu0 %v328
      %v339 = vpop.f32.mrf.mxu0
      %v340 = vadd.f32 0.0, %v339
      %v341 = vpop.f32.mrf.mxu0
      %342 = vdwg.mxu0
      %v343 = vadd.f32 %v307, %v340
      %v344 = vmul.f32 %v343, %v343
      %v345 = vsel %vm326, %v344, 0.0
      %346 = vadd.xlane.f32.xlu0 %v345
      %v347 = vpop.xlane.xlu0 %346
      %v348 = vrcp.pop 32.0
      %v349 = vmul.f32 32.0, %v348
      %v350 = vsub.f32 1.0, %v349
      %v351 = vmul.f32 %v348, %v350
      %v352 = vadd.f32 %v348, %v351
      %vm353 = vweird.f32 %v348
      %v354 = vsel %vm353, %v348, %v352
      %v355 = vmul.f32 %v347, %v354
      %v356 = vadd.f32 %v355, 1e-06
      %v357 = vrsqrt.pop %v356
      %v358 = vmul.f32 %v357, %v356
      %v359 = vmul.f32 %v358, %v357
      %v360 = vmul.f32 0.5, %v359
      %v361 = vsub.f32 1.5, %v360
      %v362 = vmul.f32 %v357, %v361
      %vm363 = vweird.f32 %v356
      %vm364 = vweird.f32 %v357
      %vm365 = vmor %vm363, %vm364
      %v366 = vsel %vm365, %v357, %v362
      %v367 = vmul.f32 %v343, %v366
      %v368 = vpack.c.bf16 %v367, %v367
      %v369 = vld [vmem:[%s3] sm:$0xf]
      %v370 = vld [vmem:[%s3 + $0x4] sm:$0xf]
      %v371 = vld [vmem:[%s3 + $0x8] sm:$0xf]
      %v372 = vld [vmem:[%s3 + $0xc] sm:$0xf]
      %v377 = vunpack.c.l.b16 %v369
      %v378 = vunpack.c.l.b16 %v370
      %v379 = vunpack.c.l.b16 %v371
      %v380 = vunpack.c.l.b16 %v372
      %v381 = vpack.c.b16 %v378, %v377
      %v382 = vpack.c.b16 %v380, %v379
      %v386 = vsel %vm326, %v368, 0
      %388 = vmatpush.bf16.msra.mxu0 0
      %389 = vmatpush.bf16.msra.mxu0 0
      %390 = vmatpush.bf16.msra.mxu0 0
      %391 = vmatpush.bf16.msra.mxu0 0
      %392 = vmatpush.bf16.msra.mxu0 0
      %393 = vmatpush.bf16.msra.mxu0 0
      %394 = vmatpush.bf16.msra.mxu0 %v382
      %395 = vmatpush.bf16.msra.mxu0 %v381
      %396 = vmatmul.bf16.gmra.mxu0 %v386
      %v397 = vpop.f32.mrf.mxu0
      %v398 = vadd.f32 0.0, %v397
      %v399 = vpop.f32.mrf.mxu0
      %400 = vdwg.mxu0
      %v401 = vld [vmem:[%s4] sm:$0xf]
      %v402 = vld [vmem:[%s4 + $0x4] sm:$0xf]
      %v403 = vld [vmem:[%s4 + $0x8] sm:$0xf]
      %v404 = vld [vmem:[%s4 + $0xc] sm:$0xf]
      %v409 = vunpack.c.l.b16 %v401
      %v410 = vunpack.c.l.b16 %v402
      %v411 = vunpack.c.l.b16 %v403
      %v412 = vunpack.c.l.b16 %v404
      %v413 = vpack.c.b16 %v410, %v409
      %v414 = vpack.c.b16 %v412, %v411
      %417 = vmatpush.bf16.msra.mxu0 0
      %418 = vmatpush.bf16.msra.mxu0 0
      %419 = vmatpush.bf16.msra.mxu0 0
      %420 = vmatpush.bf16.msra.mxu0 0
      %421 = vmatpush.bf16.msra.mxu0 0
      %422 = vmatpush.bf16.msra.mxu0 0
      %423 = vmatpush.bf16.msra.mxu0 %v414
      %424 = vmatpush.bf16.msra.mxu0 %v413
      %425 = vmatmul.bf16.gmra.mxu0 %v386
      %v426 = vpop.f32.mrf.mxu0
      %v427 = vadd.f32 0.0, %v426
      %v428 = vpop.f32.mrf.mxu0
      %429 = vdwg.mxu0
      %v430 = vxor.u32 %v398, 2147483648
      %v431 = vmul.f32 %v430, 1.442695
      %v432 = vpow.pop %v431
      %v433 = vadd.f32 %v432, 1.0
      %v434 = vrcp.pop %v433
      %v435 = vmul.f32 %v433, %v434
      %v436 = vsub.f32 1.0, %v435
      %v437 = vmul.f32 %v434, %v436
      %v438 = vadd.f32 %v434, %v437
      %vm439 = vweird.f32 %v433
      %vm440 = vweird.f32 %v434
      %vm441 = vmor %vm439, %vm440
      %v442 = vsel %vm441, %v434, %v438
      %v443 = vand.u32 2147483647, %v433
      %vm444 = vcmp.eq.f32.partialorder %v443, 8.507059e+37
      %v445 = vand.u32 %v433, 2147483648
      %v446 = vor.u32 1.1754944e-38, %v445
      %v447 = vsel %vm444, %v446, %v442
      %v448 = vmul.f32 1.0, %v447
      %v449 = vmul.f32 %v398, %v448
      %v450 = vmul.f32 %v449, %v427
      %v451 = vpack.c.bf16 %v450, %v450
      %v452 = vld [vmem:[%s5] sm:$0xf]
      %v453 = vld [vmem:[%s5 + $0x4] sm:$0xf]
      %v454 = vld [vmem:[%s5 + $0x8] sm:$0xf]
      %v455 = vld [vmem:[%s5 + $0xc] sm:$0xf]
      %v456 = vld [vmem:[%s5 + $0x10] sm:$0xf]
      %v457 = vld [vmem:[%s5 + $0x14] sm:$0xf]
      %v458 = vld [vmem:[%s5 + $0x18] sm:$0xf]
      %v459 = vld [vmem:[%s5 + $0x1c] sm:$0xf]
      %v468 = vunpack.c.l.b16 %v452
      %v469 = vunpack.c.l.b16 %v453
      %v470 = vunpack.c.l.b16 %v454
      %v471 = vunpack.c.l.b16 %v455
      %v472 = vunpack.c.l.b16 %v456
      %v473 = vunpack.c.l.b16 %v457
      %v474 = vunpack.c.l.b16 %v458
      %v475 = vunpack.c.l.b16 %v459
      %v476 = vpack.c.b16 %v469, %v468
      %v477 = vpack.c.b16 %v471, %v470
      %v478 = vpack.c.b16 %v473, %v472
      %v479 = vpack.c.b16 %v475, %v474
      %vm484 = vcmask 523264
      %v486 = vsel %vm484, %v451, 0
      %488 = vmatpush.bf16.msra.mxu0 0
      %489 = vmatpush.bf16.msra.mxu0 0
      %490 = vmatpush.bf16.msra.mxu0 0
      %491 = vmatpush.bf16.msra.mxu0 0
      %492 = vmatpush.bf16.msra.mxu0 %v479
      %493 = vmatpush.bf16.msra.mxu0 %v478
      %494 = vmatpush.bf16.msra.mxu0 %v477
      %495 = vmatpush.bf16.msra.mxu0 %v476
      %496 = vmatmul.bf16.gmra.mxu0 %v486
      %v497 = vpop.f32.mrf.mxu0
      %v498 = vadd.f32 0.0, %v497
      %v499 = vpop.f32.mrf.mxu0
      %500 = vdwg.mxu0
      %v501 = vadd.f32 %v343, %v498
      %502 = vst.msk [vmem:[%s305] sm:$0xff] %vm326, %v501
      %p503 = scmp.lt.s32.totalorder %s21, 1
      %s504 = scalar_select %p503, %s21, 1
      %p505 = scmp.lt.s32.totalorder %s22, 0
      %s506 = scalar_select %p505, %s22, 0
      %s507 = sadd.s32 %s506, %s504
      %s508 = smul.addr %s507, 8
      %s509 = scalar_lea.vmem %s6, %s508
      // Predicated region
      $region45: #{gpt_forward.9} parent=43 // pred_check
        %p510 = pneg %p189
      $region46: #{gpt_forward.9} parent=43 // pred_check_branch
        %512 = sbr.rel (%p510) target = $region48
      $region47: #{gpt_forward.9} parent=43 // pred_region
        _
      $region48: #{gpt_forward.9} parent=43 // pred_fallthru
        _
    $region44: #{gpt_forward.9} parent=5 // pred_fallthru
      _
    %p513 = scmp.le.s32.totalorder 2, %s12
    // Predicated region
    $region49: #{gpt_forward.9} parent=5 // pred_check
      %p514 = pneg %p513
    $region50: #{gpt_forward.9} parent=5 // pred_check_branch
      %516 = sbr.rel (%p514) target = $region52
    $region51: #{gpt_forward.9} parent=5 // pred_region
      %s517 = ssub.s32 %s12, 2
      // Predicated region
      $region53: #{gpt_forward.9} parent=51 // pred_check
        %p518 = pneg %p195
      $region54: #{gpt_forward.9} parent=51 // pred_check_branch
        %520 = sbr.rel (%p518) target = $region56
      $region55: #{gpt_forward.9} parent=51 // pred_region
        %p521 = scmp.lt.s32.totalorder %s23, 1
        %s522 = scalar_select %p521, %s23, 1
        %p523 = scmp.lt.s32.totalorder %s24, 0
        %s524 = scalar_select %p523, %s24, 0
        %s525 = sadd.s32 %s524, %s522
        %s526 = smul.addr %s525, 8
        %s527 = scalar_lea.vmem %s6, %s526
      $region56: #{gpt_forward.9} parent=51 // pred_fallthru
        _
    $region52: #{gpt_forward.9} parent=5 // pred_fallthru
      _
  $region6: #{gpt_forward.9} parent=0 // loop_footer
    %s16 = sadd.s32 1, %s12
  $region7: #{gpt_forward.9} parent=0 // loop_footer_branch
    %11 = sbr.rel target = $region3
  $region8: #{gpt_forward.9} parent=0 // loop_exit
    _

</llo_original>
